<compile_context>
chip_gen: v6e
topology: v6e:2x2x1
jax: 0.10.0
libtpu: 0.0.40
codegen_flags: <defaults>
</compile_context>

<pallas_src>
import functools

import jax
import jax.numpy as jnp
from jax.experimental import pallas as pl
from jax.experimental.pallas import tpu as pltpu

_LANE = 128


def _round_up(x, m):
    return (x + m - 1) // m * m


def _pick_tile_h(H, W, c_out_pad, *, acc_budget_bytes=1 << 19, cap=8):
    """Largest divisor of H (<= cap) whose f32 accumulator tile fits the VMEM budget."""
    best = 1
    for t in range(1, H + 1):
        if H % t == 0 and t <= cap and t * W * c_out_pad * 4 <= acc_budget_bytes:
            best = t
    return best


def _conv_bn_relu_kernel(x_ref, w_ref, scale_ref, shift_ref, o_ref, acc_ref,
                         *, TILE_H, W, K, C_in_p, C_out_p, act):
    # x_ref:     (1, H+K-1, W+K-1, C_in_p)  padded image for this batch element (resident)
    # w_ref:     (K, K, C_in_p, C_out_p)    conv weights (HWIO), resident
    # scale_ref: (1, C_out_p)               folded BN scale, resident
    # shift_ref: (1, C_out_p)               folded BN shift (includes conv bias), resident
    # o_ref:     (1, TILE_H, W, C_out_p)    output row-tile (lane-dense)
    # acc_ref:   (TILE_H*W, C_out_p) f32    VMEM scratch accumulator
    h = pl.program_id(1)
    row0 = pl.multiple_of(h * TILE_H, TILE_H)

    first = True
    for kh in range(K):          # static unroll: 9 taps, each a deep (>=128) MXU contraction
        for kw in range(K):
            patch = x_ref[0, pl.ds(row0 + kh, TILE_H), pl.ds(kw, W), :]   # (TILE_H, W, C_in_p)
            patch = patch.reshape(TILE_H * W, C_in_p)   # layout-preserving when W % 8 == 0
            tap = jnp.dot(patch, w_ref[kh, kw], preferred_element_type=jnp.float32)
            if first:
                acc_ref[...] = tap
                first = False
            else:
                acc_ref[...] += tap

    y = acc_ref[...] * scale_ref[...] + shift_ref[...]   # (TILE_H*W, C_out_p) * (1, C_out_p)
    if act:
        y = jnp.maximum(y, 0.0)
    o_ref[0] = y.reshape(TILE_H, W, C_out_p).astype(o_ref.dtype)


def conv2d_bn_relu(x_nchw, weight_hwio, conv_bias, bn_gamma, bn_beta,
                   bn_mean, bn_var, *, eps=1e-5, act=True):
    """x_nchw: (N, C_in, H, W) float32. Returns (N, C_out, H, W) float32."""
    N, C_in, H, W = x_nchw.shape
    K = weight_hwio.shape[0]
    C_out = weight_hwio.shape[-1]
    pad = (K - 1) // 2  # kernel_size=3, padding=1, dilation=1

    C_in_p = _round_up(C_in, _LANE)
    C_out_p = _round_up(C_out, _LANE)

    # Glue: NCHW -> NHWC; ONE pad op does both the spatial halo and the channel lane-padding.
    x_nhwc = jnp.transpose(x_nchw, (0, 2, 3, 1)).astype(jnp.float32)
    x_pad = jnp.pad(x_nhwc, ((0, 0), (pad, pad), (pad, pad), (0, C_in_p - C_in)))

    w = jnp.pad(weight_hwio.astype(jnp.float32),
                ((0, 0), (0, 0), (0, C_in_p - C_in), (0, C_out_p - C_out)))

    # Fold conv bias + inference-mode BatchNorm into per-channel scale/shift.
    scale = bn_gamma / jnp.sqrt(bn_var + eps)                       # (C_out,)
    shift = bn_beta + (conv_bias - bn_mean) * scale                 # (C_out,)
    scale_p = jnp.pad(scale.astype(jnp.float32), (0, C_out_p - C_out)).reshape(1, C_out_p)
    shift_p = jnp.pad(shift.astype(jnp.float32), (0, C_out_p - C_out)).reshape(1, C_out_p)

    TILE_H = _pick_tile_h(H, W, C_out_p)
    Hp, Wp = H + 2 * pad, W + 2 * pad
    grid = (N, H // TILE_H)

    kernel = functools.partial(_conv_bn_relu_kernel,
                               TILE_H=TILE_H, W=W, K=K,
                               C_in_p=C_in_p, C_out_p=C_out_p, act=act)

    # Rough per-step VMEM footprint (double-buffered in/out, resident weights + scratch).
    est = (Hp * Wp * C_in_p * 4 * 2
           + K * K * C_in_p * C_out_p * 4 * 2
           + TILE_H * W * C_out_p * 4 * 2
           + TILE_H * W * C_out_p * 4
           + 2 * C_out_p * 4 * 2)
    vmem_limit = int(min(max(2 * est, 32 * 1024 * 1024), 128 * 1024 * 1024))

    out_nhwc_p = pl.pallas_call(
        kernel,
        out_shape=jax.ShapeDtypeStruct((N, H, W, C_out_p), jnp.float32),
        grid_spec=pltpu.PrefetchScalarGridSpec(
            num_scalar_prefetch=0,
            grid=grid,
            in_specs=[
                # Full padded image per batch element; block index constant along h
                # -> stays resident in VMEM, re-DMA'd only when n changes.
                pl.BlockSpec((1, Hp, Wp, C_in_p), lambda n, h: (n, 0, 0, 0)),
                pl.BlockSpec((K, K, C_in_p, C_out_p), lambda n, h: (0, 0, 0, 0)),
                pl.BlockSpec((1, C_out_p), lambda n, h: (0, 0)),
                pl.BlockSpec((1, C_out_p), lambda n, h: (0, 0)),
            ],
            out_specs=pl.BlockSpec((1, TILE_H, W, C_out_p), lambda n, h: (n, h, 0, 0)),
            scratch_shapes=[pltpu.VMEM((TILE_H * W, C_out_p), jnp.float32)],
        ),
        compiler_params=pltpu.CompilerParams(
            dimension_semantics=("parallel", "parallel"),
            vmem_limit_bytes=vmem_limit),
    )(x_pad, w, scale_p, shift_p)

    # Glue: drop channel padding, NHWC -> NCHW to match the PyTorch module's convention.
    out_nhwc = out_nhwc_p[..., :C_out]
    return jnp.transpose(out_nhwc, (0, 3, 1, 2))


def _reference(x_nchw, weight_hwio, conv_bias, bn_gamma, bn_beta, bn_mean, bn_var,
               *, eps=1e-5, act=True):
    # Plain-JAX reference (same eval-mode BN semantics) for a correctness check.
    w_oihw = jnp.transpose(weight_hwio, (3, 2, 0, 1))  # HWIO -> OIHW
    y = jax.lax.conv_general_dilated(
        x_nchw, w_oihw, window_strides=(1, 1), padding=((1, 1), (1, 1)),
        dimension_numbers=("NCHW", "OIHW", "NCHW"))
    y = y + conv_bias[None, :, None, None]
    y = (y - bn_mean[None, :, None, None]) / jnp.sqrt(bn_var[None, :, None, None] + eps)
    y = y * bn_gamma[None, :, None, None] + bn_beta[None, :, None, None]
    if act:
        y = jnp.maximum(y, 0.0)
    return y


if __name__ == "__main__":
    key = jax.random.PRNGKey(0)
    k_x, k_w, k_b, k_g, k_be, k_m, k_v = jax.random.split(key, 7)

    N, C_in, H, W = 2, 4, 16, 16
    C_out, K = 8, 3

    x = jax.random.normal(k_x, (N, C_in, H, W), dtype=jnp.float32)
    weight_hwio = jax.random.normal(k_w, (K, K, C_in, C_out), dtype=jnp.float32) * 0.1
    conv_bias = jax.random.normal(k_b, (C_out,), dtype=jnp.float32) * 0.1
    bn_gamma = 1.0 + 0.1 * jax.random.normal(k_g, (C_out,), dtype=jnp.float32)
    bn_beta = 0.1 * jax.random.normal(k_be, (C_out,), dtype=jnp.float32)
    bn_mean = 0.1 * jax.random.normal(k_m, (C_out,), dtype=jnp.float32)
    bn_var = jnp.abs(jax.random.normal(k_v, (C_out,), dtype=jnp.float32)) + 0.5

    out = conv2d_bn_relu(x, weight_hwio, conv_bias, bn_gamma, bn_beta,
                         bn_mean, bn_var, act=True)
    out = jax.block_until_ready(out)

    ref = _reference(x, weight_hwio, conv_bias, bn_gamma, bn_beta,
                     bn_mean, bn_var, act=True)
    assert out.shape == (N, C_out, H, W)
    assert jnp.allclose(out, ref, atol=1e-4, rtol=1e-4), "mismatch vs reference"
    print("KERNEL_OK")
</pallas_src>

<mosaic_0001>
module attributes {stable_mosaic.version = 11 : i64} {
  func.func @_conv_bn_relu_kernel(%arg0: i32, %arg1: i32, %arg2: memref<1x18x18x128xf32, #tpu.memory_space<vmem>>, %arg3: memref<3x3x128x128xf32, #tpu.memory_space<vmem>>, %arg4: memref<1x128xf32, #tpu.memory_space<vmem>>, %arg5: memref<1x128xf32, #tpu.memory_space<vmem>>, %arg6: memref<1x8x16x128xf32, #tpu.memory_space<vmem>>, %arg7: memref<128x128xf32, #tpu.memory_space<vmem>>) attributes {dimension_semantics = [#tpu.dimension_semantics<parallel>, #tpu.dimension_semantics<parallel>], iteration_bounds = array<i64: 2, 2>, scalar_prefetch = 0 : i64, scratch_operands = 1 : i64, tpu.core_type = #tpu.core_type<tc>, window_params = [{transform_indices = @transform_0, window_bounds = array<i64: 1, 18, 18, 128>}, {pipeline_mode = #tpu.pipeline_mode<synchronous>, transform_indices = @transform_1, window_bounds = array<i64: 3, 3, 128, 128>}, {pipeline_mode = #tpu.pipeline_mode<synchronous>, transform_indices = @transform_2, window_bounds = array<i64: 1, 128>}, {pipeline_mode = #tpu.pipeline_mode<synchronous>, transform_indices = @transform_3, window_bounds = array<i64: 1, 128>}, {transform_indices = @transform_4, window_bounds = array<i64: 1, 8, 16, 128>}]} {
    %c8_i32 = arith.constant 8 : i32
    %0 = arith.muli %arg1, %c8_i32 : i32
    %1 = tpu.assume_multiple %0, 8 : i32
    %c0_i32 = arith.constant 0 : i32
    %2 = arith.addi %1, %c0_i32 : i32
    %c0 = arith.constant 0 : index
    %3 = arith.index_cast %2 : i32 to index
    %c0_0 = arith.constant 0 : index
    %c0_1 = arith.constant 0 : index
    %4 = vector.load %arg2[%c0, %3, %c0_0, %c0_1] : memref<1x18x18x128xf32, #tpu.memory_space<vmem>>, vector<1x8x16x128xf32>
    %5 = vector.shape_cast %4 : vector<1x8x16x128xf32> to vector<8x16x128xf32>
    %6 = vector.shape_cast %5 : vector<8x16x128xf32> to vector<128x128xf32>
    %c0_2 = arith.constant 0 : index
    %c0_3 = arith.constant 0 : index
    %c0_4 = arith.constant 0 : index
    %c0_5 = arith.constant 0 : index
    %7 = vector.load %arg3[%c0_2, %c0_3, %c0_4, %c0_5] : memref<3x3x128x128xf32, #tpu.memory_space<vmem>>, vector<1x1x128x128xf32>
    %8 = vector.shape_cast %7 : vector<1x1x128x128xf32> to vector<128x128xf32>
    %cst = arith.constant dense<0.000000e+00> : vector<128x128xf32>
    %9 = tpu.matmul %6, %8, %cst {dimension_numbers = #tpu.dot_dimension_numbers<[1], [0], [0], [1], [0, 0, 1, 1], [], []>} : vector<128x128xf32>, vector<128x128xf32>, vector<128x128xf32> -> vector<128x128xf32>
    %c0_6 = arith.constant 0 : index
    %c0_7 = arith.constant 0 : index
    %10 = vector.load %arg7[%c0_6, %c0_7] : memref<128x128xf32, #tpu.memory_space<vmem>>, vector<128x128xf32>
    tpu.vector_store %arg7[%c0_6, %c0_7], %9 {strides = array<i32>} : memref<128x128xf32, #tpu.memory_space<vmem>>, vector<128x128xf32>,
    %c0_i32_8 = arith.constant 0 : i32
    %11 = arith.addi %1, %c0_i32_8 : i32
    %c0_9 = arith.constant 0 : index
    %12 = arith.index_cast %11 : i32 to index
    %c1 = arith.constant 1 : index
    %c0_10 = arith.constant 0 : index
    %13 = vector.load %arg2[%c0_9, %12, %c1, %c0_10] : memref<1x18x18x128xf32, #tpu.memory_space<vmem>>, vector<1x8x16x128xf32>
    %14 = vector.shape_cast %13 : vector<1x8x16x128xf32> to vector<8x16x128xf32>
    %15 = vector.shape_cast %14 : vector<8x16x128xf32> to vector<128x128xf32>
    %c0_11 = arith.constant 0 : index
    %c1_12 = arith.constant 1 : index
    %c0_13 = arith.constant 0 : index
    %c0_14 = arith.constant 0 : index
    %16 = vector.load %arg3[%c0_11, %c1_12, %c0_13, %c0_14] : memref<3x3x128x128xf32, #tpu.memory_space<vmem>>, vector<1x1x128x128xf32>
    %17 = vector.shape_cast %16 : vector<1x1x128x128xf32> to vector<128x128xf32>
    %cst_15 = arith.constant dense<0.000000e+00> : vector<128x128xf32>
    %18 = tpu.matmul %15, %17, %cst_15 {dimension_numbers = #tpu.dot_dimension_numbers<[1], [0], [0], [1], [0, 0, 1, 1], [], []>} : vector<128x128xf32>, vector<128x128xf32>, vector<128x128xf32> -> vector<128x128xf32>
    %c0_16 = arith.constant 0 : index
    %c0_17 = arith.constant 0 : index
    %19 = vector.load %arg7[%c0_16, %c0_17] : memref<128x128xf32, #tpu.memory_space<vmem>>, vector<128x128xf32>
    %20 = arith.addf %19, %18 : vector<128x128xf32>
    %c0_18 = arith.constant 0 : index
    %c0_19 = arith.constant 0 : index
    %21 = vector.load %arg7[%c0_18, %c0_19] : memref<128x128xf32, #tpu.memory_space<vmem>>, vector<128x128xf32>
    tpu.vector_store %arg7[%c0_18, %c0_19], %20 {strides = array<i32>} : memref<128x128xf32, #tpu.memory_space<vmem>>, vector<128x128xf32>,
    %c0_i32_20 = arith.constant 0 : i32
    %22 = arith.addi %1, %c0_i32_20 : i32
    %c0_21 = arith.constant 0 : index
    %23 = arith.index_cast %22 : i32 to index
    %c2 = arith.constant 2 : index
    %c0_22 = arith.constant 0 : index
    %24 = vector.load %arg2[%c0_21, %23, %c2, %c0_22] : memref<1x18x18x128xf32, #tpu.memory_space<vmem>>, vector<1x8x16x128xf32>
    %25 = vector.shape_cast %24 : vector<1x8x16x128xf32> to vector<8x16x128xf32>
    %26 = vector.shape_cast %25 : vector<8x16x128xf32> to vector<128x128xf32>
    %c0_23 = arith.constant 0 : index
    %c2_24 = arith.constant 2 : index
    %c0_25 = arith.constant 0 : index
    %c0_26 = arith.constant 0 : index
    %27 = vector.load %arg3[%c0_23, %c2_24, %c0_25, %c0_26] : memref<3x3x128x128xf32, #tpu.memory_space<vmem>>, vector<1x1x128x128xf32>
    %28 = vector.shape_cast %27 : vector<1x1x128x128xf32> to vector<128x128xf32>
    %cst_27 = arith.constant dense<0.000000e+00> : vector<128x128xf32>
    %29 = tpu.matmul %26, %28, %cst_27 {dimension_numbers = #tpu.dot_dimension_numbers<[1], [0], [0], [1], [0, 0, 1, 1], [], []>} : vector<128x128xf32>, vector<128x128xf32>, vector<128x128xf32> -> vector<128x128xf32>
    %c0_28 = arith.constant 0 : index
    %c0_29 = arith.constant 0 : index
    %30 = vector.load %arg7[%c0_28, %c0_29] : memref<128x128xf32, #tpu.memory_space<vmem>>, vector<128x128xf32>
    %31 = arith.addf %30, %29 : vector<128x128xf32>
    %c0_30 = arith.constant 0 : index
    %c0_31 = arith.constant 0 : index
    %32 = vector.load %arg7[%c0_30, %c0_31] : memref<128x128xf32, #tpu.memory_space<vmem>>, vector<128x128xf32>
    tpu.vector_store %arg7[%c0_30, %c0_31], %31 {strides = array<i32>} : memref<128x128xf32, #tpu.memory_space<vmem>>, vector<128x128xf32>,
    %c1_i32 = arith.constant 1 : i32
    %33 = arith.addi %1, %c1_i32 : i32
    %c0_32 = arith.constant 0 : index
    %34 = arith.index_cast %33 : i32 to index
    %c0_33 = arith.constant 0 : index
    %c0_34 = arith.constant 0 : index
    %35 = vector.load %arg2[%c0_32, %34, %c0_33, %c0_34] : memref<1x18x18x128xf32, #tpu.memory_space<vmem>>, vector<1x8x16x128xf32>
    %36 = vector.shape_cast %35 : vector<1x8x16x128xf32> to vector<8x16x128xf32>
    %37 = vector.shape_cast %36 : vector<8x16x128xf32> to vector<128x128xf32>
    %c1_35 = arith.constant 1 : index
    %c0_36 = arith.constant 0 : index
    %c0_37 = arith.constant 0 : index
    %c0_38 = arith.constant 0 : index
    %38 = vector.load %arg3[%c1_35, %c0_36, %c0_37, %c0_38] : memref<3x3x128x128xf32, #tpu.memory_space<vmem>>, vector<1x1x128x128xf32>
    %39 = vector.shape_cast %38 : vector<1x1x128x128xf32> to vector<128x128xf32>
    %cst_39 = arith.constant dense<0.000000e+00> : vector<128x128xf32>
    %40 = tpu.matmul %37, %39, %cst_39 {dimension_numbers = #tpu.dot_dimension_numbers<[1], [0], [0], [1], [0, 0, 1, 1], [], []>} : vector<128x128xf32>, vector<128x128xf32>, vector<128x128xf32> -> vector<128x128xf32>
    %c0_40 = arith.constant 0 : index
    %c0_41 = arith.constant 0 : index
    %41 = vector.load %arg7[%c0_40, %c0_41] : memref<128x128xf32, #tpu.memory_space<vmem>>, vector<128x128xf32>
    %42 = arith.addf %41, %40 : vector<128x128xf32>
    %c0_42 = arith.constant 0 : index
    %c0_43 = arith.constant 0 : index
    %43 = vector.load %arg7[%c0_42, %c0_43] : memref<128x128xf32, #tpu.memory_space<vmem>>, vector<128x128xf32>
    tpu.vector_store %arg7[%c0_42, %c0_43], %42 {strides = array<i32>} : memref<128x128xf32, #tpu.memory_space<vmem>>, vector<128x128xf32>,
    %c1_i32_44 = arith.constant 1 : i32
    %44 = arith.addi %1, %c1_i32_44 : i32
    %c0_45 = arith.constant 0 : index
    %45 = arith.index_cast %44 : i32 to index
    %c1_46 = arith.constant 1 : index
    %c0_47 = arith.constant 0 : index
    %46 = vector.load %arg2[%c0_45, %45, %c1_46, %c0_47] : memref<1x18x18x128xf32, #tpu.memory_space<vmem>>, vector<1x8x16x128xf32>
    %47 = vector.shape_cast %46 : vector<1x8x16x128xf32> to vector<8x16x128xf32>
    %48 = vector.shape_cast %47 : vector<8x16x128xf32> to vector<128x128xf32>
    %c1_48 = arith.constant 1 : index
    %c1_49 = arith.constant 1 : index
    %c0_50 = arith.constant 0 : index
    %c0_51 = arith.constant 0 : index
    %49 = vector.load %arg3[%c1_48, %c1_49, %c0_50, %c0_51] : memref<3x3x128x128xf32, #tpu.memory_space<vmem>>, vector<1x1x128x128xf32>
    %50 = vector.shape_cast %49 : vector<1x1x128x128xf32> to vector<128x128xf32>
    %cst_52 = arith.constant dense<0.000000e+00> : vector<128x128xf32>
    %51 = tpu.matmul %48, %50, %cst_52 {dimension_numbers = #tpu.dot_dimension_numbers<[1], [0], [0], [1], [0, 0, 1, 1], [], []>} : vector<128x128xf32>, vector<128x128xf32>, vector<128x128xf32> -> vector<128x128xf32>
    %c0_53 = arith.constant 0 : index
    %c0_54 = arith.constant 0 : index
    %52 = vector.load %arg7[%c0_53, %c0_54] : memref<128x128xf32, #tpu.memory_space<vmem>>, vector<128x128xf32>
    %53 = arith.addf %52, %51 : vector<128x128xf32>
    %c0_55 = arith.constant 0 : index
    %c0_56 = arith.constant 0 : index
    %54 = vector.load %arg7[%c0_55, %c0_56] : memref<128x128xf32, #tpu.memory_space<vmem>>, vector<128x128xf32>
    tpu.vector_store %arg7[%c0_55, %c0_56], %53 {strides = array<i32>} : memref<128x128xf32, #tpu.memory_space<vmem>>, vector<128x128xf32>,
    %c1_i32_57 = arith.constant 1 : i32
    %55 = arith.addi %1, %c1_i32_57 : i32
    %c0_58 = arith.constant 0 : index
    %56 = arith.index_cast %55 : i32 to index
    %c2_59 = arith.constant 2 : index
    %c0_60 = arith.constant 0 : index
    %57 = vector.load %arg2[%c0_58, %56, %c2_59, %c0_60] : memref<1x18x18x128xf32, #tpu.memory_space<vmem>>, vector<1x8x16x128xf32>
    %58 = vector.shape_cast %57 : vector<1x8x16x128xf32> to vector<8x16x128xf32>
    %59 = vector.shape_cast %58 : vector<8x16x128xf32> to vector<128x128xf32>
    %c1_61 = arith.constant 1 : index
    %c2_62 = arith.constant 2 : index
    %c0_63 = arith.constant 0 : index
    %c0_64 = arith.constant 0 : index
    %60 = vector.load %arg3[%c1_61, %c2_62, %c0_63, %c0_64] : memref<3x3x128x128xf32, #tpu.memory_space<vmem>>, vector<1x1x128x128xf32>
    %61 = vector.shape_cast %60 : vector<1x1x128x128xf32> to vector<128x128xf32>
    %cst_65 = arith.constant dense<0.000000e+00> : vector<128x128xf32>
    %62 = tpu.matmul %59, %61, %cst_65 {dimension_numbers = #tpu.dot_dimension_numbers<[1], [0], [0], [1], [0, 0, 1, 1], [], []>} : vector<128x128xf32>, vector<128x128xf32>, vector<128x128xf32> -> vector<128x128xf32>
    %c0_66 = arith.constant 0 : index
    %c0_67 = arith.constant 0 : index
    %63 = vector.load %arg7[%c0_66, %c0_67] : memref<128x128xf32, #tpu.memory_space<vmem>>, vector<128x128xf32>
    %64 = arith.addf %63, %62 : vector<128x128xf32>
    %c0_68 = arith.constant 0 : index
    %c0_69 = arith.constant 0 : index
    %65 = vector.load %arg7[%c0_68, %c0_69] : memref<128x128xf32, #tpu.memory_space<vmem>>, vector<128x128xf32>
    tpu.vector_store %arg7[%c0_68, %c0_69], %64 {strides = array<i32>} : memref<128x128xf32, #tpu.memory_space<vmem>>, vector<128x128xf32>,
    %c2_i32 = arith.constant 2 : i32
    %66 = arith.addi %1, %c2_i32 : i32
    %c0_70 = arith.constant 0 : index
    %67 = arith.index_cast %66 : i32 to index
    %c0_71 = arith.constant 0 : index
    %c0_72 = arith.constant 0 : index
    %68 = vector.load %arg2[%c0_70, %67, %c0_71, %c0_72] : memref<1x18x18x128xf32, #tpu.memory_space<vmem>>, vector<1x8x16x128xf32>
    %69 = vector.shape_cast %68 : vector<1x8x16x128xf32> to vector<8x16x128xf32>
    %70 = vector.shape_cast %69 : vector<8x16x128xf32> to vector<128x128xf32>
    %c2_73 = arith.constant 2 : index
    %c0_74 = arith.constant 0 : index
    %c0_75 = arith.constant 0 : index
    %c0_76 = arith.constant 0 : index
    %71 = vector.load %arg3[%c2_73, %c0_74, %c0_75, %c0_76] : memref<3x3x128x128xf32, #tpu.memory_space<vmem>>, vector<1x1x128x128xf32>
    %72 = vector.shape_cast %71 : vector<1x1x128x128xf32> to vector<128x128xf32>
    %cst_77 = arith.constant dense<0.000000e+00> : vector<128x128xf32>
    %73 = tpu.matmul %70, %72, %cst_77 {dimension_numbers = #tpu.dot_dimension_numbers<[1], [0], [0], [1], [0, 0, 1, 1], [], []>} : vector<128x128xf32>, vector<128x128xf32>, vector<128x128xf32> -> vector<128x128xf32>
    %c0_78 = arith.constant 0 : index
    %c0_79 = arith.constant 0 : index
    %74 = vector.load %arg7[%c0_78, %c0_79] : memref<128x128xf32, #tpu.memory_space<vmem>>, vector<128x128xf32>
    %75 = arith.addf %74, %73 : vector<128x128xf32>
    %c0_80 = arith.constant 0 : index
    %c0_81 = arith.constant 0 : index
    %76 = vector.load %arg7[%c0_80, %c0_81] : memref<128x128xf32, #tpu.memory_space<vmem>>, vector<128x128xf32>
    tpu.vector_store %arg7[%c0_80, %c0_81], %75 {strides = array<i32>} : memref<128x128xf32, #tpu.memory_space<vmem>>, vector<128x128xf32>,
    %c2_i32_82 = arith.constant 2 : i32
    %77 = arith.addi %1, %c2_i32_82 : i32
    %c0_83 = arith.constant 0 : index
    %78 = arith.index_cast %77 : i32 to index
    %c1_84 = arith.constant 1 : index
    %c0_85 = arith.constant 0 : index
    %79 = vector.load %arg2[%c0_83, %78, %c1_84, %c0_85] : memref<1x18x18x128xf32, #tpu.memory_space<vmem>>, vector<1x8x16x128xf32>
    %80 = vector.shape_cast %79 : vector<1x8x16x128xf32> to vector<8x16x128xf32>
    %81 = vector.shape_cast %80 : vector<8x16x128xf32> to vector<128x128xf32>
    %c2_86 = arith.constant 2 : index
    %c1_87 = arith.constant 1 : index
    %c0_88 = arith.constant 0 : index
    %c0_89 = arith.constant 0 : index
    %82 = vector.load %arg3[%c2_86, %c1_87, %c0_88, %c0_89] : memref<3x3x128x128xf32, #tpu.memory_space<vmem>>, vector<1x1x128x128xf32>
    %83 = vector.shape_cast %82 : vector<1x1x128x128xf32> to vector<128x128xf32>
    %cst_90 = arith.constant dense<0.000000e+00> : vector<128x128xf32>
    %84 = tpu.matmul %81, %83, %cst_90 {dimension_numbers = #tpu.dot_dimension_numbers<[1], [0], [0], [1], [0, 0, 1, 1], [], []>} : vector<128x128xf32>, vector<128x128xf32>, vector<128x128xf32> -> vector<128x128xf32>
    %c0_91 = arith.constant 0 : index
    %c0_92 = arith.constant 0 : index
    %85 = vector.load %arg7[%c0_91, %c0_92] : memref<128x128xf32, #tpu.memory_space<vmem>>, vector<128x128xf32>
    %86 = arith.addf %85, %84 : vector<128x128xf32>
    %c0_93 = arith.constant 0 : index
    %c0_94 = arith.constant 0 : index
    %87 = vector.load %arg7[%c0_93, %c0_94] : memref<128x128xf32, #tpu.memory_space<vmem>>, vector<128x128xf32>
    tpu.vector_store %arg7[%c0_93, %c0_94], %86 {strides = array<i32>} : memref<128x128xf32, #tpu.memory_space<vmem>>, vector<128x128xf32>,
    %c2_i32_95 = arith.constant 2 : i32
    %88 = arith.addi %1, %c2_i32_95 : i32
    %c0_96 = arith.constant 0 : index
    %89 = arith.index_cast %88 : i32 to index
    %c2_97 = arith.constant 2 : index
    %c0_98 = arith.constant 0 : index
    %90 = vector.load %arg2[%c0_96, %89, %c2_97, %c0_98] : memref<1x18x18x128xf32, #tpu.memory_space<vmem>>, vector<1x8x16x128xf32>
    %91 = vector.shape_cast %90 : vector<1x8x16x128xf32> to vector<8x16x128xf32>
    %92 = vector.shape_cast %91 : vector<8x16x128xf32> to vector<128x128xf32>
    %c2_99 = arith.constant 2 : index
    %c2_100 = arith.constant 2 : index
    %c0_101 = arith.constant 0 : index
    %c0_102 = arith.constant 0 : index
    %93 = vector.load %arg3[%c2_99, %c2_100, %c0_101, %c0_102] : memref<3x3x128x128xf32, #tpu.memory_space<vmem>>, vector<1x1x128x128xf32>
    %94 = vector.shape_cast %93 : vector<1x1x128x128xf32> to vector<128x128xf32>
    %cst_103 = arith.constant dense<0.000000e+00> : vector<128x128xf32>
    %95 = tpu.matmul %92, %94, %cst_103 {dimension_numbers = #tpu.dot_dimension_numbers<[1], [0], [0], [1], [0, 0, 1, 1], [], []>} : vector<128x128xf32>, vector<128x128xf32>, vector<128x128xf32> -> vector<128x128xf32>
    %c0_104 = arith.constant 0 : index
    %c0_105 = arith.constant 0 : index
    %96 = vector.load %arg7[%c0_104, %c0_105] : memref<128x128xf32, #tpu.memory_space<vmem>>, vector<128x128xf32>
    %97 = arith.addf %96, %95 : vector<128x128xf32>
    %c0_106 = arith.constant 0 : index
    %c0_107 = arith.constant 0 : index
    %98 = vector.load %arg7[%c0_106, %c0_107] : memref<128x128xf32, #tpu.memory_space<vmem>>, vector<128x128xf32>
    tpu.vector_store %arg7[%c0_106, %c0_107], %97 {strides = array<i32>} : memref<128x128xf32, #tpu.memory_space<vmem>>, vector<128x128xf32>,
    %c0_108 = arith.constant 0 : index
    %c0_109 = arith.constant 0 : index
    %99 = vector.load %arg7[%c0_108, %c0_109] : memref<128x128xf32, #tpu.memory_space<vmem>>, vector<128x128xf32>
    %c0_110 = arith.constant 0 : index
    %c0_111 = arith.constant 0 : index
    %100 = vector.load %arg4[%c0_110, %c0_111] : memref<1x128xf32, #tpu.memory_space<vmem>>, vector<1x128xf32>
    %101 = vector.broadcast %100 : vector<1x128xf32> to vector<128x128xf32>
    %102 = arith.mulf %99, %101 : vector<128x128xf32>
    %c0_112 = arith.constant 0 : index
    %c0_113 = arith.constant 0 : index
    %103 = vector.load %arg5[%c0_112, %c0_113] : memref<1x128xf32, #tpu.memory_space<vmem>>, vector<1x128xf32>
    %104 = vector.broadcast %103 : vector<1x128xf32> to vector<128x128xf32>
    %105 = arith.addf %102, %104 : vector<128x128xf32>
    %cst_114 = arith.constant 0.000000e+00 : f32
    %106 = vector.broadcast %cst_114 : f32 to vector<128x128xf32>
    %107 = arith.maximumf %105, %106 : vector<128x128xf32>
    %108 = vector.shape_cast %107 : vector<128x128xf32> to vector<8x16x128xf32>
    %c0_115 = arith.constant 0 : index
    %c0_116 = arith.constant 0 : index
    %c0_117 = arith.constant 0 : index
    %c0_118 = arith.constant 0 : index
    %109 = vector.load %arg6[%c0_115, %c0_116, %c0_117, %c0_118] : memref<1x8x16x128xf32, #tpu.memory_space<vmem>>, vector<1x8x16x128xf32>
    %110 = vector.shape_cast %109 : vector<1x8x16x128xf32> to vector<8x16x128xf32>
    %111 = vector.shape_cast %108 : vector<8x16x128xf32> to vector<1x8x16x128xf32>
    tpu.vector_store %arg6[%c0_115, %c0_116, %c0_117, %c0_118], %111 {strides = array<i32>} : memref<1x8x16x128xf32, #tpu.memory_space<vmem>>, vector<1x8x16x128xf32>,
    return
  }
  func.func @transform_0(%arg0: i32, %arg1: i32) -> (i32, i32, i32, i32) {
    %c0_i32 = arith.constant 0 : i32
    %c0_i32_0 = arith.constant 0 : i32
    %c0_i32_1 = arith.constant 0 : i32
    %c0_i32_2 = arith.constant 0 : i32
    return %arg0, %c0_i32, %c0_i32_0, %c0_i32_1 : i32, i32, i32, i32
  }
  func.func @transform_1(%arg0: i32, %arg1: i32) -> (i32, i32, i32, i32) {
    %c0_i32 = arith.constant 0 : i32
    %c0_i32_0 = arith.constant 0 : i32
    %c0_i32_1 = arith.constant 0 : i32
    %c0_i32_2 = arith.constant 0 : i32
    %c0_i32_3 = arith.constant 0 : i32
    return %c0_i32, %c0_i32_0, %c0_i32_1, %c0_i32_2 : i32, i32, i32, i32
  }
  func.func @transform_2(%arg0: i32, %arg1: i32) -> (i32, i32) {
    %c0_i32 = arith.constant 0 : i32
    %c0_i32_0 = arith.constant 0 : i32
    %c0_i32_1 = arith.constant 0 : i32
    return %c0_i32, %c0_i32_0 : i32, i32
  }
  func.func @transform_3(%arg0: i32, %arg1: i32) -> (i32, i32) {
    %c0_i32 = arith.constant 0 : i32
    %c0_i32_0 = arith.constant 0 : i32
    %c0_i32_1 = arith.constant 0 : i32
    return %c0_i32, %c0_i32_0 : i32, i32
  }
  func.func @transform_4(%arg0: i32, %arg1: i32) -> (i32, i32, i32, i32) {
    %c0_i32 = arith.constant 0 : i32
    %c0_i32_0 = arith.constant 0 : i32
    %c0_i32_1 = arith.constant 0 : i32
    return %arg0, %arg1, %c0_i32, %c0_i32_0 : i32, i32, i32, i32
  }
}

</mosaic_0001>

<llo_original>
// kernel: tpu_custom_call.1
$region0: #{tpu_custom_call.1}
  #allocation0 [shape = 'u32[]', space=smem, size = 0x4, offset = 0x4, fixed_abs, tag = 'smem constant byte address 0x4 - core index']
  #allocation1 [shape = 'u32[144,128]{1,0:T(1,128)}', space=vmem, size = 0x12000, scoped, tag = 'internal scratch']
  #allocation2 [shape = 'f32[128,128]{1,0:T(8,128)}', space=vmem, size = 0x10000, scoped, tag = 'scratch operand']
  %s0 = inlined_call_operand.vmem [shape: f32[2,18,18,128], index: 0, kind: input, shape index: {}]
  %s1 = inlined_call_operand.vmem [shape: f32[3,3,128,128], index: 1, kind: input, shape index: {}]
  %s2 = inlined_call_operand.vmem [shape: f32[1,128], index: 2, kind: input, shape index: {}]
  %s3 = inlined_call_operand.vmem [shape: f32[1,128], index: 3, kind: input, shape index: {}]
  %s4 = inlined_call_operand.hbm [shape: f32[2,16,16,128], index: 4, kind: output, shape index: {}]
  %s5 = sld [smem:[#allocation0]]
  $region49: #{tpu_custom_call.1} parent=0
    _
  %s7 = ssub.s32 1, %s5
  %s8 = scalar_select 0, %s7, %s5
  $region1: #{tpu_custom_call.1} parent=0
    #allocation3 [shape = 'u8[131072]{0}', space=vmem, size = 0x20000, scoped, tag = 'output window, operand 0']
    #allocation4 [shape = 's32[2]{0}', space=sflag, size = 0x8, scoped, tag = 'scoped memory for tpu_custom_call.1']
    %9 = vsyncpa [#allocation4], 0
    %s10 = scalar_lea.sflag [#allocation4], 1
    %11 = vsyncpa %s10, 0
    loop: start=0, step=1, limit=6
    $region2: #{tpu_custom_call.1} parent=1 // loop_pre_header
      _
    $region3: #{tpu_custom_call.1} parent=1 // loop_header
      %s13 = sphi 0, %s17
      %p14 = scmp.ge.s32.totalorder %s13, 6
      %s20 = sphi 0, %s32
      %s21 = sphi 0, %s28
      %s22 = sphi 0, %s20
      %s23 = sphi 0, %s21
      %s24 = sphi 0, %s22
      %s25 = sphi 0, %s23
      %s35 = sphi 0, %s37
      %s38 = sphi 0, %s35
      %s39 = sphi 0, %s38
      %s55 = sphi 0, %s39
      %s59 = sphi 0, %s59
      %s61 = sphi 0, %s59
      %s62 = sphi 0, %s61
      %s76 = sphi 0, %s62
      %s80 = sphi 0, %s80
      %s82 = sphi 0, %s80
      %s83 = sphi 0, %s82
      %s97 = sphi 0, %s83
      %s101 = sphi 0, %s101
      %s103 = sphi 0, %s101
      %s104 = sphi 0, %s103
      %s118 = sphi 0, %s104
      %s126 = sphi 0, %s128
      %s129 = sphi 0, %s126
      %s130 = sphi 0, %s129
      %s146 = sphi 0, %s130
    $region4: #{tpu_custom_call.1} parent=1 // loop_header_branch
      %16 = sbr.rel (%p14) target = $region8
    $region5: #{tpu_custom_call.1} parent=1 // loop_body
      %s18 = ssub.s32 %s13, 1
      %s19 = ssub.s32 %s13, 2
      %s26 = sadd.s32 1, %s21
      %p27 = scmp.ge.s32.totalorder %s26, 2
      %s28 = scalar_select %p27, 0, %s26
      %s29 = sadd.s32 1, %s20
      %s30 = scalar_select %p27, %s29, %s20
      %p31 = scmp.ge.s32.totalorder %s30, 2
      %s32 = scalar_select %p31, 0, %s30
      %s33 = ssub.s32 %s20, %s32
      %p34 = scmp.eq.s32.totalorder %s33, 0
      %s36 = sadd.s32 %s35, 1
      %s37 = scalar_select %p34, %s35, %s36
      %p40 = pneg %p34
      %p41 = scmp.eq.s32.totalorder %s13, 3
      %p42 = por %p40, %p41
      %p43 = scmp.ne.s32.totalorder %s35, %s38
      %p44 = scmp.eq.s32.totalorder %s13, 0
      %p45 = por %p43, %p44
      %p46 = scmp.ne.s32.totalorder %s35, %s38
      %p47 = scmp.eq.s32.totalorder %s18, 3
      %p48 = por %p46, %p47
      %p49 = scmp.ne.s32.totalorder %s38, %s39
      %p50 = scmp.eq.s32.totalorder %s18, 0
      %p51 = por %p49, %p50
      %p52 = scmp.ne.s32.totalorder %s38, %s39
      %p53 = scmp.eq.s32.totalorder %s19, 3
      %p54 = por %p52, %p53
      %p56 = scmp.ne.s32.totalorder %s39, %s55
      %p57 = scmp.eq.s32.totalorder %s19, 0
      %p58 = por %p56, %p57
      %s60 = sadd.s32 %s59, 1
      %p63 = scmp.eq.s32.totalorder %s13, 3
      %p64 = scmp.ne.s32.totalorder %s59, %s61
      %p65 = scmp.eq.s32.totalorder %s13, 0
      %p66 = por %p64, %p65
      %p67 = scmp.ne.s32.totalorder %s59, %s61
      %p68 = scmp.eq.s32.totalorder %s18, 3
      %p69 = por %p67, %p68
      %p70 = scmp.ne.s32.totalorder %s61, %s62
      %p71 = scmp.eq.s32.totalorder %s18, 0
      %p72 = por %p70, %p71
      %p73 = scmp.ne.s32.totalorder %s61, %s62
      %p74 = scmp.eq.s32.totalorder %s19, 3
      %p75 = por %p73, %p74
      %p77 = scmp.ne.s32.totalorder %s62, %s76
      %p78 = scmp.eq.s32.totalorder %s19, 0
      %p79 = por %p77, %p78
      %s81 = sadd.s32 %s80, 1
      %p84 = scmp.eq.s32.totalorder %s13, 3
      %p85 = scmp.ne.s32.totalorder %s80, %s82
      %p86 = scmp.eq.s32.totalorder %s13, 0
      %p87 = por %p85, %p86
      %p88 = scmp.ne.s32.totalorder %s80, %s82
      %p89 = scmp.eq.s32.totalorder %s18, 3
      %p90 = por %p88, %p89
      %p91 = scmp.ne.s32.totalorder %s82, %s83
      %p92 = scmp.eq.s32.totalorder %s18, 0
      %p93 = por %p91, %p92
      %p94 = scmp.ne.s32.totalorder %s82, %s83
      %p95 = scmp.eq.s32.totalorder %s19, 3
      %p96 = por %p94, %p95
      %p98 = scmp.ne.s32.totalorder %s83, %s97
      %p99 = scmp.eq.s32.totalorder %s19, 0
      %p100 = por %p98, %p99
      %s102 = sadd.s32 %s101, 1
      %p105 = scmp.eq.s32.totalorder %s13, 3
      %p106 = scmp.ne.s32.totalorder %s101, %s103
      %p107 = scmp.eq.s32.totalorder %s13, 0
      %p108 = por %p106, %p107
      %p109 = scmp.ne.s32.totalorder %s101, %s103
      %p110 = scmp.eq.s32.totalorder %s18, 3
      %p111 = por %p109, %p110
      %p112 = scmp.ne.s32.totalorder %s103, %s104
      %p113 = scmp.eq.s32.totalorder %s18, 0
      %p114 = por %p112, %p113
      %p115 = scmp.ne.s32.totalorder %s103, %s104
      %p116 = scmp.eq.s32.totalorder %s19, 3
      %p117 = por %p115, %p116
      %p119 = scmp.ne.s32.totalorder %s104, %s118
      %p120 = scmp.eq.s32.totalorder %s19, 0
      %p121 = por %p119, %p120
      %s122 = ssub.s32 %s20, %s32
      %s123 = ssub.s32 %s21, %s28
      %s124 = sor.u32 %s122, %s123
      %p125 = scmp.eq.s32.totalorder %s124, 0
      %s127 = sadd.s32 %s126, 1
      %s128 = scalar_select %p125, %s126, %s127
      %p131 = pneg %p125
      %p132 = scmp.eq.s32.totalorder %s13, 3
      %p133 = por %p131, %p132
      %p134 = scmp.ne.s32.totalorder %s126, %s129
      %p135 = scmp.eq.s32.totalorder %s13, 0
      %p136 = por %p134, %p135
      %p137 = scmp.ne.s32.totalorder %s126, %s129
      %p138 = scmp.eq.s32.totalorder %s18, 3
      %p139 = por %p137, %p138
      %p140 = scmp.ne.s32.totalorder %s129, %s130
      %p141 = scmp.eq.s32.totalorder %s18, 0
      %p142 = por %p140, %p141
      %p143 = scmp.ne.s32.totalorder %s129, %s130
      %p144 = scmp.eq.s32.totalorder %s19, 3
      %p145 = por %p143, %p144
      %p147 = scmp.ne.s32.totalorder %s130, %s146
      %p148 = scmp.eq.s32.totalorder %s19, 0
      %p149 = por %p147, %p148
      %p150 = scmp.le.s32.totalorder 1, %s13
      %p151 = scmp.lt.s32.totalorder %s13, 5
      %p152 = pnand %p150, %p151
      %p153 = pneg %p152
      // Predicated region
      $region9: #{tpu_custom_call.1} parent=5 // pred_check
        _
      $region10: #{tpu_custom_call.1} parent=5 // pred_check_branch
        %155 = sbr.rel (%p152) target = $region12
      $region11: #{tpu_custom_call.1} parent=5 // pred_region
        %s156 = ssub.s32 %s13, 1
        // Predicated region
        $region13: #{tpu_custom_call.1} parent=11 // pred_check
          %p157 = pneg %p72
        $region14: #{tpu_custom_call.1} parent=11 // pred_check_branch
          %159 = sbr.rel (%p157) target = $region16
        $region15: #{tpu_custom_call.1} parent=11 // pred_region
          _
        $region16: #{tpu_custom_call.1} parent=11 // pred_fallthru
          _
        // Predicated region
        $region17: #{tpu_custom_call.1} parent=11 // pred_check
          %p160 = pneg %p93
        $region18: #{tpu_custom_call.1} parent=11 // pred_check_branch
          %162 = sbr.rel (%p160) target = $region20
        $region19: #{tpu_custom_call.1} parent=11 // pred_region
          _
        $region20: #{tpu_custom_call.1} parent=11 // pred_fallthru
          _
        // Predicated region
        $region21: #{tpu_custom_call.1} parent=11 // pred_check
          %p163 = pneg %p114
        $region22: #{tpu_custom_call.1} parent=11 // pred_check_branch
          %165 = sbr.rel (%p163) target = $region24
        $region23: #{tpu_custom_call.1} parent=11 // pred_region
          _
        $region24: #{tpu_custom_call.1} parent=11 // pred_fallthru
          _
      $region12: #{tpu_custom_call.1} parent=5 // pred_fallthru
        _
      %p166 = scmp.lt.s32.totalorder %s13, 4
      // Predicated region
      $region25: #{tpu_custom_call.1} parent=5 // pred_check
        %p167 = pneg %p166
      $region26: #{tpu_custom_call.1} parent=5 // pred_check_branch
        %169 = sbr.rel (%p167) target = $region28
      $region27: #{tpu_custom_call.1} parent=5 // pred_region
        // Predicated region
        $region29: #{tpu_custom_call.1} parent=27 // pred_check
          %p170 = pneg %p45
        $region30: #{tpu_custom_call.1} parent=27 // pred_check_branch
          %172 = sbr.rel (%p170) target = $region32
        $region31: #{tpu_custom_call.1} parent=27 // pred_region
          %p173 = scmp.lt.s32.totalorder %s20, 1
          %s174 = scalar_select %p173, %s20, 1
          %s175 = smul.addr %s174, 54
          %s176 = smul.addr %s175, 8
          %s177 = scalar_lea.vmem %s0, %s176
        $region32: #{tpu_custom_call.1} parent=27 // pred_fallthru
          _
      $region28: #{tpu_custom_call.1} parent=5 // pred_fallthru
        _
      %p178 = scmp.le.s32.totalorder 1, %s13
      %p179 = scmp.lt.s32.totalorder %s13, 5
      %p180 = pnand %p178, %p179
      %p181 = pneg %p180
      // Predicated region
      $region33: #{tpu_custom_call.1} parent=5 // pred_check
        _
      $region34: #{tpu_custom_call.1} parent=5 // pred_check_branch
        %183 = sbr.rel (%p180) target = $region36
      $region35: #{tpu_custom_call.1} parent=5 // pred_region
        %s184 = ssub.s32 %s13, 1
        %p185 = scmp.lt.s32.totalorder %s22, 1
        %s186 = scalar_select %p185, %s22, 1
        %s187 = smul.addr %s186, 54
        %s188 = smul.addr %s187, 8
        %s189 = scalar_lea.vmem %s0, %s188
        %p190 = pneg %p51
        %p191 = pneg %p48
        %p192 = pneg %p72
        %p193 = pneg %p69
        %p194 = pneg %p93
        %p195 = pneg %p90
        %p196 = pneg %p114
        %p197 = pneg %p111
        %p198 = pneg %p142
        %p199 = pneg %p139
        %s200 = sand.u32 %s129, 1
        %s201 = scalar_lea.sflag [#allocation4], %s200
        %s202 = sand.u32 %s129, 1
        %s203 = smul.addr %s202, 128
        %s204 = scalar_lea.vmem [#allocation3], %s203
        %p205 = scmp.lt.s32.totalorder %s22, 1
        %s206 = scalar_select %p205, %s22, 1
        %s207 = smul.addr %s206, 54
        %s208 = smul.addr %s207, 8
        %s209 = scalar_lea.vmem %s0, %s208
        %s210 = smul.u32 8, %s23
        %s211 = smul.u32 %s23, 8
        %s212 = smul.u32 %s211, 24
        %s213 = scalar_lea.vmem %s209, %s212
        %v214 = vld [vmem:[%s213] sm:$0xff]
        %v215 = vld [vmem:[%s213 + $0x8] sm:$0xff]
        %v216 = vld [vmem:[%s213 + $0x18] sm:$0xff]
        %v217 = vld [vmem:[%s213 + $0x20] sm:$0xff]
        %v218 = vld [vmem:[%s213 + $0x30] sm:$0xff]
        %v219 = vld [vmem:[%s213 + $0x38] sm:$0xff]
        %v220 = vld [vmem:[%s213 + $0x48] sm:$0xff]
        %v221 = vld [vmem:[%s213 + $0x50] sm:$0xff]
        %v222 = vld [vmem:[%s213 + $0x60] sm:$0xff]
        %v223 = vld [vmem:[%s213 + $0x68] sm:$0xff]
        %v224 = vld [vmem:[%s213 + $0x78] sm:$0xff]
        %v225 = vld [vmem:[%s213 + $0x80] sm:$0xff]
        %v226 = vld [vmem:[%s213 + $0x90] sm:$0xff]
        %v227 = vld [vmem:[%s213 + $0x98] sm:$0xff]
        %v228 = vld [vmem:[%s213 + $0xa8] sm:$0xff]
        %v229 = vld [vmem:[%s213 + $0xb0] sm:$0xff]
        %v230 = vld [vmem:[%s1] sm:$0xff]
        %v231 = vld [vmem:[%s1 + $0x8] sm:$0xff]
        %v232 = vld [vmem:[%s1 + $0x10] sm:$0xff]
        %v233 = vld [vmem:[%s1 + $0x18] sm:$0xff]
        %v234 = vld [vmem:[%s1 + $0x20] sm:$0xff]
        %v235 = vld [vmem:[%s1 + $0x28] sm:$0xff]
        %v236 = vld [vmem:[%s1 + $0x30] sm:$0xff]
        %v237 = vld [vmem:[%s1 + $0x38] sm:$0xff]
        %v238 = vld [vmem:[%s1 + $0x40] sm:$0xff]
        %v239 = vld [vmem:[%s1 + $0x48] sm:$0xff]
        %v240 = vld [vmem:[%s1 + $0x50] sm:$0xff]
        %v241 = vld [vmem:[%s1 + $0x58] sm:$0xff]
        %v242 = vld [vmem:[%s1 + $0x60] sm:$0xff]
        %v243 = vld [vmem:[%s1 + $0x68] sm:$0xff]
        %v244 = vld [vmem:[%s1 + $0x70] sm:$0xff]
        %v245 = vld [vmem:[%s1 + $0x78] sm:$0xff]
        %246 = vmatprep.subr.mxu0 0.0
        %247 = vmatpush1.msra.mxu0 %v245
        %248 = vmatprep.subr.mxu0 0.0
        %249 = vmatpush1.msra.mxu0 %v244
        %250 = vmatprep.subr.mxu0 0.0
        %251 = vmatpush1.msra.mxu0 %v243
        %252 = vmatprep.subr.mxu0 0.0
        %253 = vmatpush1.msra.mxu0 %v242
        %254 = vmatprep.subr.mxu0 0.0
        %255 = vmatpush1.msra.mxu0 %v241
        %256 = vmatprep.subr.mxu0 0.0
        %257 = vmatpush1.msra.mxu0 %v240
        %258 = vmatprep.subr.mxu0 0.0
        %259 = vmatpush1.msra.mxu0 %v239
        %260 = vmatprep.subr.mxu0 0.0
        %261 = vmatpush1.msra.mxu0 %v238
        %262 = vmatprep.subr.mxu0 0.0
        %263 = vmatpush1.msra.mxu0 %v237
        %264 = vmatprep.subr.mxu0 0.0
        %265 = vmatpush1.msra.mxu0 %v236
        %266 = vmatprep.subr.mxu0 0.0
        %267 = vmatpush1.msra.mxu0 %v235
        %268 = vmatprep.subr.mxu0 0.0
        %269 = vmatpush1.msra.mxu0 %v234
        %270 = vmatprep.subr.mxu0 0.0
        %271 = vmatpush1.msra.mxu0 %v233
        %272 = vmatprep.subr.mxu0 0.0
        %273 = vmatpush1.msra.mxu0 %v232
        %274 = vmatprep.subr.mxu0 0.0
        %275 = vmatpush1.msra.mxu0 %v231
        %276 = vmatprep.subr.mxu0 0.0
        %277 = vmatpush1.msra.mxu0 %v230
        %278 = vmatprep.subr.mxu0 0.0
        %279 = vmatpush2.msra.mxu0 0.0
        %280 = vmatprep.subr.mxu0 0.0
        %281 = vmatpush2.msra.mxu0 0.0
        %282 = vmatprep.subr.mxu0 0.0
        %283 = vmatpush2.msra.mxu0 0.0
        %284 = vmatprep.subr.mxu0 0.0
        %285 = vmatpush2.msra.mxu0 0.0
        %286 = vmatprep.subr.mxu0 0.0
        %287 = vmatpush2.msra.mxu0 0.0
        %288 = vmatprep.subr.mxu0 0.0
        %289 = vmatpush2.msra.mxu0 0.0
        %290 = vmatprep.subr.mxu0 0.0
        %291 = vmatpush2.msra.mxu0 0.0
        %292 = vmatprep.subr.mxu0 0.0
        %293 = vmatpush2.msra.mxu0 0.0
        %294 = vmatprep.subr.mxu0 0.0
        %295 = vmatpush2.msra.mxu0 0.0
        %296 = vmatprep.subr.mxu0 0.0
        %297 = vmatpush2.msra.mxu0 0.0
        %298 = vmatprep.subr.mxu0 0.0
        %299 = vmatpush2.msra.mxu0 0.0
        %300 = vmatprep.subr.mxu0 0.0
        %301 = vmatpush2.msra.mxu0 0.0
        %302 = vmatprep.subr.mxu0 0.0
        %303 = vmatpush2.msra.mxu0 0.0
        %304 = vmatprep.subr.mxu0 0.0
        %305 = vmatpush2.msra.mxu0 0.0
        %306 = vmatprep.subr.mxu0 0.0
        %307 = vmatpush2.msra.mxu0 0.0
        %308 = vmatprep.subr.mxu0 0.0
        %309 = vmatpush2.msra.mxu0 0.0
        %310 = vmatprep.mubr.f32.mxu0 0.0
        %311 = vmatmul.mubr.f32.gmra.mxu0 %v214
        %v312 = vpop.f32.mrf.mxu0
        %v313 = vadd.f32 0.0, %v312
        %v314 = vpop.f32.mrf.mxu0
        %315 = vmatprep.mubr.f32.mxu0 0.0
        %316 = vmatmul.mubr.f32.gmra.mxu0 %v215
        %v317 = vpop.f32.mrf.mxu0
        %v318 = vadd.f32 0.0, %v317
        %v319 = vpop.f32.mrf.mxu0
        %320 = vmatprep.mubr.f32.mxu0 0.0
        %321 = vmatmul.mubr.f32.gmra.mxu0 %v216
        %v322 = vpop.f32.mrf.mxu0
        %v323 = vadd.f32 0.0, %v322
        %v324 = vpop.f32.mrf.mxu0
        %325 = vmatprep.mubr.f32.mxu0 0.0
        %326 = vmatmul.mubr.f32.gmra.mxu0 %v217
        %v327 = vpop.f32.mrf.mxu0
        %v328 = vadd.f32 0.0, %v327
        %v329 = vpop.f32.mrf.mxu0
        %330 = vmatprep.mubr.f32.mxu0 0.0
        %331 = vmatmul.mubr.f32.gmra.mxu0 %v218
        %v332 = vpop.f32.mrf.mxu0
        %v333 = vadd.f32 0.0, %v332
        %v334 = vpop.f32.mrf.mxu0
        %335 = vmatprep.mubr.f32.mxu0 0.0
        %336 = vmatmul.mubr.f32.gmra.mxu0 %v219
        %v337 = vpop.f32.mrf.mxu0
        %v338 = vadd.f32 0.0, %v337
        %v339 = vpop.f32.mrf.mxu0
        %340 = vmatprep.mubr.f32.mxu0 0.0
        %341 = vmatmul.mubr.f32.gmra.mxu0 %v220
        %v342 = vpop.f32.mrf.mxu0
        %v343 = vadd.f32 0.0, %v342
        %v344 = vpop.f32.mrf.mxu0
        %345 = vmatprep.mubr.f32.mxu0 0.0
        %346 = vmatmul.mubr.f32.gmra.mxu0 %v221
        %v347 = vpop.f32.mrf.mxu0
        %v348 = vadd.f32 0.0, %v347
        %v349 = vpop.f32.mrf.mxu0
        %350 = vmatprep.mubr.f32.mxu0 0.0
        %351 = vmatmul.mubr.f32.gmra.mxu0 %v222
        %v352 = vpop.f32.mrf.mxu0
        %v353 = vadd.f32 0.0, %v352
        %v354 = vpop.f32.mrf.mxu0
        %355 = vmatprep.mubr.f32.mxu0 0.0
        %356 = vmatmul.mubr.f32.gmra.mxu0 %v223
        %v357 = vpop.f32.mrf.mxu0
        %v358 = vadd.f32 0.0, %v357
        %v359 = vpop.f32.mrf.mxu0
        %360 = vmatprep.mubr.f32.mxu0 0.0
        %361 = vmatmul.mubr.f32.gmra.mxu0 %v224
        %v362 = vpop.f32.mrf.mxu0
        %v363 = vadd.f32 0.0, %v362
        %v364 = vpop.f32.mrf.mxu0
        %365 = vmatprep.mubr.f32.mxu0 0.0
        %366 = vmatmul.mubr.f32.gmra.mxu0 %v225
        %v367 = vpop.f32.mrf.mxu0
        %v368 = vadd.f32 0.0, %v367
        %v369 = vpop.f32.mrf.mxu0
        %370 = vmatprep.mubr.f32.mxu0 0.0
        %371 = vmatmul.mubr.f32.gmra.mxu0 %v226
        %v372 = vpop.f32.mrf.mxu0
        %v373 = vadd.f32 0.0, %v372
        %v374 = vpop.f32.mrf.mxu0
        %375 = vmatprep.mubr.f32.mxu0 0.0
        %376 = vmatmul.mubr.f32.gmra.mxu0 %v227
        %v377 = vpop.f32.mrf.mxu0
        %v378 = vadd.f32 0.0, %v377
        %v379 = vpop.f32.mrf.mxu0
        %380 = vmatprep.mubr.f32.mxu0 0.0
        %381 = vmatmul.mubr.f32.gmra.mxu0 %v228
        %v382 = vpop.f32.mrf.mxu0
        %v383 = vadd.f32 0.0, %v382
        %v384 = vpop.f32.mrf.mxu0
        %385 = vmatprep.mubr.f32.mxu0 0.0
        %386 = vmatmul.mubr.f32.gmra.mxu0 %v229
        %v387 = vpop.f32.mrf.mxu0
        %v388 = vadd.f32 0.0, %v387
        %v389 = vpop.f32.mrf.mxu0
        %390 = vdwg.mxu0
        %391 = vst [vmem:[#allocation2] sm:$0xff] %v313
        %392 = vst [vmem:[#allocation2 + $0x8] sm:$0xff] %v318
        %393 = vst [vmem:[#allocation2 + $0x10] sm:$0xff] %v323
        %394 = vst [vmem:[#allocation2 + $0x18] sm:$0xff] %v328
        %395 = vst [vmem:[#allocation2 + $0x20] sm:$0xff] %v333
        %396 = vst [vmem:[#allocation2 + $0x28] sm:$0xff] %v338
        %397 = vst [vmem:[#allocation2 + $0x30] sm:$0xff] %v343
        %398 = vst [vmem:[#allocation2 + $0x38] sm:$0xff] %v348
        %399 = vst [vmem:[#allocation2 + $0x40] sm:$0xff] %v353
        %400 = vst [vmem:[#allocation2 + $0x48] sm:$0xff] %v358
        %401 = vst [vmem:[#allocation2 + $0x50] sm:$0xff] %v363
        %402 = vst [vmem:[#allocation2 + $0x58] sm:$0xff] %v368
        %403 = vst [vmem:[#allocation2 + $0x60] sm:$0xff] %v373
        %404 = vst [vmem:[#allocation2 + $0x68] sm:$0xff] %v378
        %405 = vst [vmem:[#allocation2 + $0x70] sm:$0xff] %v383
        %406 = vst [vmem:[#allocation2 + $0x78] sm:$0xff] %v388
        %v407 = vld [vmem:[%s213 + $0x1] sm:$0xff]
        %v408 = vld [vmem:[%s213 + $0x9] sm:$0xff]
        %v409 = vld [vmem:[%s213 + $0x19] sm:$0xff]
        %v410 = vld [vmem:[%s213 + $0x21] sm:$0xff]
        %v411 = vld [vmem:[%s213 + $0x31] sm:$0xff]
        %v412 = vld [vmem:[%s213 + $0x39] sm:$0xff]
        %v413 = vld [vmem:[%s213 + $0x49] sm:$0xff]
        %v414 = vld [vmem:[%s213 + $0x51] sm:$0xff]
        %v415 = vld [vmem:[%s213 + $0x61] sm:$0xff]
        %v416 = vld [vmem:[%s213 + $0x69] sm:$0xff]
        %v417 = vld [vmem:[%s213 + $0x79] sm:$0xff]
        %v418 = vld [vmem:[%s213 + $0x81] sm:$0xff]
        %v419 = vld [vmem:[%s213 + $0x91] sm:$0xff]
        %v420 = vld [vmem:[%s213 + $0x99] sm:$0xff]
        %v421 = vld [vmem:[%s213 + $0xa9] sm:$0xff]
        %v422 = vld [vmem:[%s213 + $0xb1] sm:$0xff]
        %s423 = scalar_lea.vmem %s1, 128
        %v424 = vld [vmem:[%s423] sm:$0xff]
        %v425 = vld [vmem:[%s423 + $0x8] sm:$0xff]
        %v426 = vld [vmem:[%s423 + $0x10] sm:$0xff]
        %v427 = vld [vmem:[%s423 + $0x18] sm:$0xff]
        %v428 = vld [vmem:[%s423 + $0x20] sm:$0xff]
        %v429 = vld [vmem:[%s423 + $0x28] sm:$0xff]
        %v430 = vld [vmem:[%s423 + $0x30] sm:$0xff]
        %v431 = vld [vmem:[%s423 + $0x38] sm:$0xff]
        %v432 = vld [vmem:[%s423 + $0x40] sm:$0xff]
        %v433 = vld [vmem:[%s423 + $0x48] sm:$0xff]
        %v434 = vld [vmem:[%s423 + $0x50] sm:$0xff]
        %v435 = vld [vmem:[%s423 + $0x58] sm:$0xff]
        %v436 = vld [vmem:[%s423 + $0x60] sm:$0xff]
        %v437 = vld [vmem:[%s423 + $0x68] sm:$0xff]
        %v438 = vld [vmem:[%s423 + $0x70] sm:$0xff]
        %v439 = vld [vmem:[%s423 + $0x78] sm:$0xff]
        %440 = vmatprep.subr.mxu0 0.0
        %441 = vmatpush1.msra.mxu0 %v439
        %442 = vmatprep.subr.mxu0 0.0
        %443 = vmatpush1.msra.mxu0 %v438
        %444 = vmatprep.subr.mxu0 0.0
        %445 = vmatpush1.msra.mxu0 %v437
        %446 = vmatprep.subr.mxu0 0.0
        %447 = vmatpush1.msra.mxu0 %v436
        %448 = vmatprep.subr.mxu0 0.0
        %449 = vmatpush1.msra.mxu0 %v435
        %450 = vmatprep.subr.mxu0 0.0
        %451 = vmatpush1.msra.mxu0 %v434
        %452 = vmatprep.subr.mxu0 0.0
        %453 = vmatpush1.msra.mxu0 %v433
        %454 = vmatprep.subr.mxu0 0.0
        %455 = vmatpush1.msra.mxu0 %v432
        %456 = vmatprep.subr.mxu0 0.0
        %457 = vmatpush1.msra.mxu0 %v431
        %458 = vmatprep.subr.mxu0 0.0
        %459 = vmatpush1.msra.mxu0 %v430
        %460 = vmatprep.subr.mxu0 0.0
        %461 = vmatpush1.msra.mxu0 %v429
        %462 = vmatprep.subr.mxu0 0.0
        %463 = vmatpush1.msra.mxu0 %v428
        %464 = vmatprep.subr.mxu0 0.0
        %465 = vmatpush1.msra.mxu0 %v427
        %466 = vmatprep.subr.mxu0 0.0
        %467 = vmatpush1.msra.mxu0 %v426
        %468 = vmatprep.subr.mxu0 0.0
        %469 = vmatpush1.msra.mxu0 %v425
        %470 = vmatprep.subr.mxu0 0.0
        %471 = vmatpush1.msra.mxu0 %v424
        %472 = vmatprep.subr.mxu0 0.0
        %473 = vmatpush2.msra.mxu0 0.0
        %474 = vmatprep.subr.mxu0 0.0
        %475 = vmatpush2.msra.mxu0 0.0
        %476 = vmatprep.subr.mxu0 0.0
        %477 = vmatpush2.msra.mxu0 0.0
        %478 = vmatprep.subr.mxu0 0.0
        %479 = vmatpush2.msra.mxu0 0.0
        %480 = vmatprep.subr.mxu0 0.0
        %481 = vmatpush2.msra.mxu0 0.0
        %482 = vmatprep.subr.mxu0 0.0
        %483 = vmatpush2.msra.mxu0 0.0
        %484 = vmatprep.subr.mxu0 0.0
        %485 = vmatpush2.msra.mxu0 0.0
        %486 = vmatprep.subr.mxu0 0.0
        %487 = vmatpush2.msra.mxu0 0.0
        %488 = vmatprep.subr.mxu0 0.0
        %489 = vmatpush2.msra.mxu0 0.0
        %490 = vmatprep.subr.mxu0 0.0
        %491 = vmatpush2.msra.mxu0 0.0
        %492 = vmatprep.subr.mxu0 0.0
        %493 = vmatpush2.msra.mxu0 0.0
        %494 = vmatprep.subr.mxu0 0.0
        %495 = vmatpush2.msra.mxu0 0.0
        %496 = vmatprep.subr.mxu0 0.0
        %497 = vmatpush2.msra.mxu0 0.0
        %498 = vmatprep.subr.mxu0 0.0
        %499 = vmatpush2.msra.mxu0 0.0
        %500 = vmatprep.subr.mxu0 0.0
        %501 = vmatpush2.msra.mxu0 0.0
        %502 = vmatprep.subr.mxu0 0.0
        %503 = vmatpush2.msra.mxu0 0.0
        %504 = vmatprep.mubr.f32.mxu0 0.0
        %505 = vmatmul.mubr.f32.gmra.mxu0 %v407
        %v506 = vpop.f32.mrf.mxu0
        %v507 = vadd.f32 0.0, %v506
        %v508 = vpop.f32.mrf.mxu0
        %509 = vmatprep.mubr.f32.mxu0 0.0
        %510 = vmatmul.mubr.f32.gmra.mxu0 %v408
        %v511 = vpop.f32.mrf.mxu0
        %v512 = vadd.f32 0.0, %v511
        %v513 = vpop.f32.mrf.mxu0
        %514 = vmatprep.mubr.f32.mxu0 0.0
        %515 = vmatmul.mubr.f32.gmra.mxu0 %v409
        %v516 = vpop.f32.mrf.mxu0
        %v517 = vadd.f32 0.0, %v516
        %v518 = vpop.f32.mrf.mxu0
        %519 = vmatprep.mubr.f32.mxu0 0.0
        %520 = vmatmul.mubr.f32.gmra.mxu0 %v410
        %v521 = vpop.f32.mrf.mxu0
        %v522 = vadd.f32 0.0, %v521
        %v523 = vpop.f32.mrf.mxu0
        %524 = vmatprep.mubr.f32.mxu0 0.0
        %525 = vmatmul.mubr.f32.gmra.mxu0 %v411
        %v526 = vpop.f32.mrf.mxu0
        %v527 = vadd.f32 0.0, %v526
        %v528 = vpop.f32.mrf.mxu0
        %529 = vmatprep.mubr.f32.mxu0 0.0
        %530 = vmatmul.mubr.f32.gmra.mxu0 %v412
        %v531 = vpop.f32.mrf.mxu0
        %v532 = vadd.f32 0.0, %v531
        %v533 = vpop.f32.mrf.mxu0
        %534 = vmatprep.mubr.f32.mxu0 0.0
        %535 = vmatmul.mubr.f32.gmra.mxu0 %v413
        %v536 = vpop.f32.mrf.mxu0
        %v537 = vadd.f32 0.0, %v536
        %v538 = vpop.f32.mrf.mxu0
        %539 = vmatprep.mubr.f32.mxu0 0.0
        %540 = vmatmul.mubr.f32.gmra.mxu0 %v414
        %v541 = vpop.f32.mrf.mxu0
        %v542 = vadd.f32 0.0, %v541
        %v543 = vpop.f32.mrf.mxu0
        %544 = vmatprep.mubr.f32.mxu0 0.0
        %545 = vmatmul.mubr.f32.gmra.mxu0 %v415
        %v546 = vpop.f32.mrf.mxu0
        %v547 = vadd.f32 0.0, %v546
        %v548 = vpop.f32.mrf.mxu0
        %549 = vmatprep.mubr.f32.mxu0 0.0
        %550 = vmatmul.mubr.f32.gmra.mxu0 %v416
        %v551 = vpop.f32.mrf.mxu0
        %v552 = vadd.f32 0.0, %v551
        %v553 = vpop.f32.mrf.mxu0
        %554 = vmatprep.mubr.f32.mxu0 0.0
        %555 = vmatmul.mubr.f32.gmra.mxu0 %v417
        %v556 = vpop.f32.mrf.mxu0
        %v557 = vadd.f32 0.0, %v556
        %v558 = vpop.f32.mrf.mxu0
        %559 = vmatprep.mubr.f32.mxu0 0.0
        %560 = vmatmul.mubr.f32.gmra.mxu0 %v418
        %v561 = vpop.f32.mrf.mxu0
        %v562 = vadd.f32 0.0, %v561
        %v563 = vpop.f32.mrf.mxu0
        %564 = vmatprep.mubr.f32.mxu0 0.0
        %565 = vmatmul.mubr.f32.gmra.mxu0 %v419
        %v566 = vpop.f32.mrf.mxu0
        %v567 = vadd.f32 0.0, %v566
        %v568 = vpop.f32.mrf.mxu0
        %569 = vmatprep.mubr.f32.mxu0 0.0
        %570 = vmatmul.mubr.f32.gmra.mxu0 %v420
        %v571 = vpop.f32.mrf.mxu0
        %v572 = vadd.f32 0.0, %v571
        %v573 = vpop.f32.mrf.mxu0
        %574 = vmatprep.mubr.f32.mxu0 0.0
        %575 = vmatmul.mubr.f32.gmra.mxu0 %v421
        %v576 = vpop.f32.mrf.mxu0
        %v577 = vadd.f32 0.0, %v576
        %v578 = vpop.f32.mrf.mxu0
        %579 = vmatprep.mubr.f32.mxu0 0.0
        %580 = vmatmul.mubr.f32.gmra.mxu0 %v422
        %v581 = vpop.f32.mrf.mxu0
        %v582 = vadd.f32 0.0, %v581
        %v583 = vpop.f32.mrf.mxu0
        %584 = vdwg.mxu0
        %v585 = vld [vmem:[#allocation2] sm:$0xff]
        %v586 = vld [vmem:[#allocation2 + $0x8] sm:$0xff]
        %v587 = vld [vmem:[#allocation2 + $0x10] sm:$0xff]
        %v588 = vld [vmem:[#allocation2 + $0x18] sm:$0xff]
        %v589 = vld [vmem:[#allocation2 + $0x20] sm:$0xff]
        %v590 = vld [vmem:[#allocation2 + $0x28] sm:$0xff]
        %v591 = vld [vmem:[#allocation2 + $0x30] sm:$0xff]
        %v592 = vld [vmem:[#allocation2 + $0x38] sm:$0xff]
        %v593 = vld [vmem:[#allocation2 + $0x40] sm:$0xff]
        %v594 = vld [vmem:[#allocation2 + $0x48] sm:$0xff]
        %v595 = vld [vmem:[#allocation2 + $0x50] sm:$0xff]
        %v596 = vld [vmem:[#allocation2 + $0x58] sm:$0xff]
        %v597 = vld [vmem:[#allocation2 + $0x60] sm:$0xff]
        %v598 = vld [vmem:[#allocation2 + $0x68] sm:$0xff]
        %v599 = vld [vmem:[#allocation2 + $0x70] sm:$0xff]
        %v600 = vld [vmem:[#allocation2 + $0x78] sm:$0xff]
        %v601 = vadd.f32 %v585, %v507
        %v602 = vadd.f32 %v586, %v512
        %v603 = vadd.f32 %v587, %v517
        %v604 = vadd.f32 %v588, %v522
        %v605 = vadd.f32 %v589, %v527
        %v606 = vadd.f32 %v590, %v532
        %v607 = vadd.f32 %v591, %v537
        %v608 = vadd.f32 %v592, %v542
        %v609 = vadd.f32 %v593, %v547
        %v610 = vadd.f32 %v594, %v552
        %v611 = vadd.f32 %v595, %v557
        %v612 = vadd.f32 %v596, %v562
        %v613 = vadd.f32 %v597, %v567
        %v614 = vadd.f32 %v598, %v572
        %v615 = vadd.f32 %v599, %v577
        %v616 = vadd.f32 %v600, %v582
        %617 = vst [vmem:[#allocation2] sm:$0xff] %v601
        %618 = vst [vmem:[#allocation2 + $0x8] sm:$0xff] %v602
        %619 = vst [vmem:[#allocation2 + $0x10] sm:$0xff] %v603
        %620 = vst [vmem:[#allocation2 + $0x18] sm:$0xff] %v604
        %621 = vst [vmem:[#allocation2 + $0x20] sm:$0xff] %v605
        %622 = vst [vmem:[#allocation2 + $0x28] sm:$0xff] %v606
        %623 = vst [vmem:[#allocation2 + $0x30] sm:$0xff] %v607
        %624 = vst [vmem:[#allocation2 + $0x38] sm:$0xff] %v608
        %625 = vst [vmem:[#allocation2 + $0x40] sm:$0xff] %v609
        %626 = vst [vmem:[#allocation2 + $0x48] sm:$0xff] %v610
        %627 = vst [vmem:[#allocation2 + $0x50] sm:$0xff] %v611
        %628 = vst [vmem:[#allocation2 + $0x58] sm:$0xff] %v612
        %629 = vst [vmem:[#allocation2 + $0x60] sm:$0xff] %v613
        %630 = vst [vmem:[#allocation2 + $0x68] sm:$0xff] %v614
        %631 = vst [vmem:[#allocation2 + $0x70] sm:$0xff] %v615
        %632 = vst [vmem:[#allocation2 + $0x78] sm:$0xff] %v616
        %v633 = vld [vmem:[%s213 + $0x2] sm:$0xff]
        %v634 = vld [vmem:[%s213 + $0xa] sm:$0xff]
        %v635 = vld [vmem:[%s213 + $0x1a] sm:$0xff]
        %v636 = vld [vmem:[%s213 + $0x22] sm:$0xff]
        %v637 = vld [vmem:[%s213 + $0x32] sm:$0xff]
        %v638 = vld [vmem:[%s213 + $0x3a] sm:$0xff]
        %v639 = vld [vmem:[%s213 + $0x4a] sm:$0xff]
        %v640 = vld [vmem:[%s213 + $0x52] sm:$0xff]
        %v641 = vld [vmem:[%s213 + $0x62] sm:$0xff]
        %v642 = vld [vmem:[%s213 + $0x6a] sm:$0xff]
        %v643 = vld [vmem:[%s213 + $0x7a] sm:$0xff]
        %v644 = vld [vmem:[%s213 + $0x82] sm:$0xff]
        %v645 = vld [vmem:[%s213 + $0x92] sm:$0xff]
        %v646 = vld [vmem:[%s213 + $0x9a] sm:$0xff]
        %v647 = vld [vmem:[%s213 + $0xaa] sm:$0xff]
        %v648 = vld [vmem:[%s213 + $0xb2] sm:$0xff]
        %s649 = scalar_lea.vmem %s1, 256
        %v650 = vld [vmem:[%s649] sm:$0xff]
        %v651 = vld [vmem:[%s649 + $0x8] sm:$0xff]
        %v652 = vld [vmem:[%s649 + $0x10] sm:$0xff]
        %v653 = vld [vmem:[%s649 + $0x18] sm:$0xff]
        %v654 = vld [vmem:[%s649 + $0x20] sm:$0xff]
        %v655 = vld [vmem:[%s649 + $0x28] sm:$0xff]
        %v656 = vld [vmem:[%s649 + $0x30] sm:$0xff]
        %v657 = vld [vmem:[%s649 + $0x38] sm:$0xff]
        %v658 = vld [vmem:[%s649 + $0x40] sm:$0xff]
        %v659 = vld [vmem:[%s649 + $0x48] sm:$0xff]
        %v660 = vld [vmem:[%s649 + $0x50] sm:$0xff]
        %v661 = vld [vmem:[%s649 + $0x58] sm:$0xff]
        %v662 = vld [vmem:[%s649 + $0x60] sm:$0xff]
        %v663 = vld [vmem:[%s649 + $0x68] sm:$0xff]
        %v664 = vld [vmem:[%s649 + $0x70] sm:$0xff]
        %v665 = vld [vmem:[%s649 + $0x78] sm:$0xff]
        %666 = vmatprep.subr.mxu0 0.0
        %667 = vmatpush1.msra.mxu0 %v665
        %668 = vmatprep.subr.mxu0 0.0
        %669 = vmatpush1.msra.mxu0 %v664
        %670 = vmatprep.subr.mxu0 0.0
        %671 = vmatpush1.msra.mxu0 %v663
        %672 = vmatprep.subr.mxu0 0.0
        %673 = vmatpush1.msra.mxu0 %v662
        %674 = vmatprep.subr.mxu0 0.0
        %675 = vmatpush1.msra.mxu0 %v661
        %676 = vmatprep.subr.mxu0 0.0
        %677 = vmatpush1.msra.mxu0 %v660
        %678 = vmatprep.subr.mxu0 0.0
        %679 = vmatpush1.msra.mxu0 %v659
        %680 = vmatprep.subr.mxu0 0.0
        %681 = vmatpush1.msra.mxu0 %v658
        %682 = vmatprep.subr.mxu0 0.0
        %683 = vmatpush1.msra.mxu0 %v657
        %684 = vmatprep.subr.mxu0 0.0
        %685 = vmatpush1.msra.mxu0 %v656
        %686 = vmatprep.subr.mxu0 0.0
        %687 = vmatpush1.msra.mxu0 %v655
        %688 = vmatprep.subr.mxu0 0.0
        %689 = vmatpush1.msra.mxu0 %v654
        %690 = vmatprep.subr.mxu0 0.0
        %691 = vmatpush1.msra.mxu0 %v653
        %692 = vmatprep.subr.mxu0 0.0
        %693 = vmatpush1.msra.mxu0 %v652
        %694 = vmatprep.subr.mxu0 0.0
        %695 = vmatpush1.msra.mxu0 %v651
        %696 = vmatprep.subr.mxu0 0.0
        %697 = vmatpush1.msra.mxu0 %v650
        %698 = vmatprep.subr.mxu0 0.0
        %699 = vmatpush2.msra.mxu0 0.0
        %700 = vmatprep.subr.mxu0 0.0
        %701 = vmatpush2.msra.mxu0 0.0
        %702 = vmatprep.subr.mxu0 0.0
        %703 = vmatpush2.msra.mxu0 0.0
        %704 = vmatprep.subr.mxu0 0.0
        %705 = vmatpush2.msra.mxu0 0.0
        %706 = vmatprep.subr.mxu0 0.0
        %707 = vmatpush2.msra.mxu0 0.0
        %708 = vmatprep.subr.mxu0 0.0
        %709 = vmatpush2.msra.mxu0 0.0
        %710 = vmatprep.subr.mxu0 0.0
        %711 = vmatpush2.msra.mxu0 0.0
        %712 = vmatprep.subr.mxu0 0.0
        %713 = vmatpush2.msra.mxu0 0.0
        %714 = vmatprep.subr.mxu0 0.0
        %715 = vmatpush2.msra.mxu0 0.0
        %716 = vmatprep.subr.mxu0 0.0
        %717 = vmatpush2.msra.mxu0 0.0
        %718 = vmatprep.subr.mxu0 0.0
        %719 = vmatpush2.msra.mxu0 0.0
        %720 = vmatprep.subr.mxu0 0.0
        %721 = vmatpush2.msra.mxu0 0.0
        %722 = vmatprep.subr.mxu0 0.0
        %723 = vmatpush2.msra.mxu0 0.0
        %724 = vmatprep.subr.mxu0 0.0
        %725 = vmatpush2.msra.mxu0 0.0
        %726 = vmatprep.subr.mxu0 0.0
        %727 = vmatpush2.msra.mxu0 0.0
        %728 = vmatprep.subr.mxu0 0.0
        %729 = vmatpush2.msra.mxu0 0.0
        %730 = vmatprep.mubr.f32.mxu0 0.0
        %731 = vmatmul.mubr.f32.gmra.mxu0 %v633
        %v732 = vpop.f32.mrf.mxu0
        %v733 = vadd.f32 0.0, %v732
        %v734 = vpop.f32.mrf.mxu0
        %735 = vmatprep.mubr.f32.mxu0 0.0
        %736 = vmatmul.mubr.f32.gmra.mxu0 %v634
        %v737 = vpop.f32.mrf.mxu0
        %v738 = vadd.f32 0.0, %v737
        %v739 = vpop.f32.mrf.mxu0
        %740 = vmatprep.mubr.f32.mxu0 0.0
        %741 = vmatmul.mubr.f32.gmra.mxu0 %v635
        %v742 = vpop.f32.mrf.mxu0
        %v743 = vadd.f32 0.0, %v742
        %v744 = vpop.f32.mrf.mxu0
        %745 = vmatprep.mubr.f32.mxu0 0.0
        %746 = vmatmul.mubr.f32.gmra.mxu0 %v636
        %v747 = vpop.f32.mrf.mxu0
        %v748 = vadd.f32 0.0, %v747
        %v749 = vpop.f32.mrf.mxu0
        %750 = vmatprep.mubr.f32.mxu0 0.0
        %751 = vmatmul.mubr.f32.gmra.mxu0 %v637
        %v752 = vpop.f32.mrf.mxu0
        %v753 = vadd.f32 0.0, %v752
        %v754 = vpop.f32.mrf.mxu0
        %755 = vmatprep.mubr.f32.mxu0 0.0
        %756 = vmatmul.mubr.f32.gmra.mxu0 %v638
        %v757 = vpop.f32.mrf.mxu0
        %v758 = vadd.f32 0.0, %v757
        %v759 = vpop.f32.mrf.mxu0
        %760 = vmatprep.mubr.f32.mxu0 0.0
        %761 = vmatmul.mubr.f32.gmra.mxu0 %v639
        %v762 = vpop.f32.mrf.mxu0
        %v763 = vadd.f32 0.0, %v762
        %v764 = vpop.f32.mrf.mxu0
        %765 = vmatprep.mubr.f32.mxu0 0.0
        %766 = vmatmul.mubr.f32.gmra.mxu0 %v640
        %v767 = vpop.f32.mrf.mxu0
        %v768 = vadd.f32 0.0, %v767
        %v769 = vpop.f32.mrf.mxu0
        %770 = vmatprep.mubr.f32.mxu0 0.0
        %771 = vmatmul.mubr.f32.gmra.mxu0 %v641
        %v772 = vpop.f32.mrf.mxu0
        %v773 = vadd.f32 0.0, %v772
        %v774 = vpop.f32.mrf.mxu0
        %775 = vmatprep.mubr.f32.mxu0 0.0
        %776 = vmatmul.mubr.f32.gmra.mxu0 %v642
        %v777 = vpop.f32.mrf.mxu0
        %v778 = vadd.f32 0.0, %v777
        %v779 = vpop.f32.mrf.mxu0
        %780 = vmatprep.mubr.f32.mxu0 0.0
        %781 = vmatmul.mubr.f32.gmra.mxu0 %v643
        %v782 = vpop.f32.mrf.mxu0
        %v783 = vadd.f32 0.0, %v782
        %v784 = vpop.f32.mrf.mxu0
        %785 = vmatprep.mubr.f32.mxu0 0.0
        %786 = vmatmul.mubr.f32.gmra.mxu0 %v644
        %v787 = vpop.f32.mrf.mxu0
        %v788 = vadd.f32 0.0, %v787
        %v789 = vpop.f32.mrf.mxu0
        %790 = vmatprep.mubr.f32.mxu0 0.0
        %791 = vmatmul.mubr.f32.gmra.mxu0 %v645
        %v792 = vpop.f32.mrf.mxu0
        %v793 = vadd.f32 0.0, %v792
        %v794 = vpop.f32.mrf.mxu0
        %795 = vmatprep.mubr.f32.mxu0 0.0
        %796 = vmatmul.mubr.f32.gmra.mxu0 %v646
        %v797 = vpop.f32.mrf.mxu0
        %v798 = vadd.f32 0.0, %v797
        %v799 = vpop.f32.mrf.mxu0
        %800 = vmatprep.mubr.f32.mxu0 0.0
        %801 = vmatmul.mubr.f32.gmra.mxu0 %v647
        %v802 = vpop.f32.mrf.mxu0
        %v803 = vadd.f32 0.0, %v802
        %v804 = vpop.f32.mrf.mxu0
        %805 = vmatprep.mubr.f32.mxu0 0.0
        %806 = vmatmul.mubr.f32.gmra.mxu0 %v648
        %v807 = vpop.f32.mrf.mxu0
        %v808 = vadd.f32 0.0, %v807
        %v809 = vpop.f32.mrf.mxu0
        %810 = vdwg.mxu0
        %v811 = vld [vmem:[#allocation2] sm:$0xff]
        %v812 = vld [vmem:[#allocation2 + $0x8] sm:$0xff]
        %v813 = vld [vmem:[#allocation2 + $0x10] sm:$0xff]
        %v814 = vld [vmem:[#allocation2 + $0x18] sm:$0xff]
        %v815 = vld [vmem:[#allocation2 + $0x20] sm:$0xff]
        %v816 = vld [vmem:[#allocation2 + $0x28] sm:$0xff]
        %v817 = vld [vmem:[#allocation2 + $0x30] sm:$0xff]
        %v818 = vld [vmem:[#allocation2 + $0x38] sm:$0xff]
        %v819 = vld [vmem:[#allocation2 + $0x40] sm:$0xff]
        %v820 = vld [vmem:[#allocation2 + $0x48] sm:$0xff]
        %v821 = vld [vmem:[#allocation2 + $0x50] sm:$0xff]
        %v822 = vld [vmem:[#allocation2 + $0x58] sm:$0xff]
        %v823 = vld [vmem:[#allocation2 + $0x60] sm:$0xff]
        %v824 = vld [vmem:[#allocation2 + $0x68] sm:$0xff]
        %v825 = vld [vmem:[#allocation2 + $0x70] sm:$0xff]
        %v826 = vld [vmem:[#allocation2 + $0x78] sm:$0xff]
        %v827 = vadd.f32 %v811, %v733
        %v828 = vadd.f32 %v812, %v738
        %v829 = vadd.f32 %v813, %v743
        %v830 = vadd.f32 %v814, %v748
        %v831 = vadd.f32 %v815, %v753
        %v832 = vadd.f32 %v816, %v758
        %v833 = vadd.f32 %v817, %v763
        %v834 = vadd.f32 %v818, %v768
        %v835 = vadd.f32 %v819, %v773
        %v836 = vadd.f32 %v820, %v778
        %v837 = vadd.f32 %v821, %v783
        %v838 = vadd.f32 %v822, %v788
        %v839 = vadd.f32 %v823, %v793
        %v840 = vadd.f32 %v824, %v798
        %v841 = vadd.f32 %v825, %v803
        %v842 = vadd.f32 %v826, %v808
        %843 = vst [vmem:[#allocation2] sm:$0xff] %v827
        %844 = vst [vmem:[#allocation2 + $0x8] sm:$0xff] %v828
        %845 = vst [vmem:[#allocation2 + $0x10] sm:$0xff] %v829
        %846 = vst [vmem:[#allocation2 + $0x18] sm:$0xff] %v830
        %847 = vst [vmem:[#allocation2 + $0x20] sm:$0xff] %v831
        %848 = vst [vmem:[#allocation2 + $0x28] sm:$0xff] %v832
        %849 = vst [vmem:[#allocation2 + $0x30] sm:$0xff] %v833
        %850 = vst [vmem:[#allocation2 + $0x38] sm:$0xff] %v834
        %851 = vst [vmem:[#allocation2 + $0x40] sm:$0xff] %v835
        %852 = vst [vmem:[#allocation2 + $0x48] sm:$0xff] %v836
        %853 = vst [vmem:[#allocation2 + $0x50] sm:$0xff] %v837
        %854 = vst [vmem:[#allocation2 + $0x58] sm:$0xff] %v838
        %855 = vst [vmem:[#allocation2 + $0x60] sm:$0xff] %v839
        %856 = vst [vmem:[#allocation2 + $0x68] sm:$0xff] %v840
        %857 = vst [vmem:[#allocation2 + $0x70] sm:$0xff] %v841
        %858 = vst [vmem:[#allocation2 + $0x78] sm:$0xff] %v842
        %s859 = sadd.s32 %s211, 1
        %s860 = smul.u32 %s859, 24
        %s861 = scalar_lea.vmem %s209, %s860
        %v862 = vld [vmem:[%s861] sm:$0xff]
        %v863 = vld [vmem:[%s861 + $0x8] sm:$0xff]
        %v864 = vld [vmem:[%s861 + $0x18] sm:$0xff]
        %v865 = vld [vmem:[%s861 + $0x20] sm:$0xff]
        %v866 = vld [vmem:[%s861 + $0x30] sm:$0xff]
        %v867 = vld [vmem:[%s861 + $0x38] sm:$0xff]
        %v868 = vld [vmem:[%s861 + $0x48] sm:$0xff]
        %v869 = vld [vmem:[%s861 + $0x50] sm:$0xff]
        %v870 = vld [vmem:[%s861 + $0x60] sm:$0xff]
        %v871 = vld [vmem:[%s861 + $0x68] sm:$0xff]
        %v872 = vld [vmem:[%s861 + $0x78] sm:$0xff]
        %v873 = vld [vmem:[%s861 + $0x80] sm:$0xff]
        %v874 = vld [vmem:[%s861 + $0x90] sm:$0xff]
        %v875 = vld [vmem:[%s861 + $0x98] sm:$0xff]
        %v876 = vld [vmem:[%s861 + $0xa8] sm:$0xff]
        %v877 = vld [vmem:[%s861 + $0xb0] sm:$0xff]
        %s878 = scalar_lea.vmem %s1, 384
        %v879 = vld [vmem:[%s878] sm:$0xff]
        %v880 = vld [vmem:[%s878 + $0x8] sm:$0xff]
        %v881 = vld [vmem:[%s878 + $0x10] sm:$0xff]
        %v882 = vld [vmem:[%s878 + $0x18] sm:$0xff]
        %v883 = vld [vmem:[%s878 + $0x20] sm:$0xff]
        %v884 = vld [vmem:[%s878 + $0x28] sm:$0xff]
        %v885 = vld [vmem:[%s878 + $0x30] sm:$0xff]
        %v886 = vld [vmem:[%s878 + $0x38] sm:$0xff]
        %v887 = vld [vmem:[%s878 + $0x40] sm:$0xff]
        %v888 = vld [vmem:[%s878 + $0x48] sm:$0xff]
        %v889 = vld [vmem:[%s878 + $0x50] sm:$0xff]
        %v890 = vld [vmem:[%s878 + $0x58] sm:$0xff]
        %v891 = vld [vmem:[%s878 + $0x60] sm:$0xff]
        %v892 = vld [vmem:[%s878 + $0x68] sm:$0xff]
        %v893 = vld [vmem:[%s878 + $0x70] sm:$0xff]
        %v894 = vld [vmem:[%s878 + $0x78] sm:$0xff]
        %895 = vmatprep.subr.mxu0 0.0
        %896 = vmatpush1.msra.mxu0 %v894
        %897 = vmatprep.subr.mxu0 0.0
        %898 = vmatpush1.msra.mxu0 %v893
        %899 = vmatprep.subr.mxu0 0.0
        %900 = vmatpush1.msra.mxu0 %v892
        %901 = vmatprep.subr.mxu0 0.0
        %902 = vmatpush1.msra.mxu0 %v891
        %903 = vmatprep.subr.mxu0 0.0
        %904 = vmatpush1.msra.mxu0 %v890
        %905 = vmatprep.subr.mxu0 0.0
        %906 = vmatpush1.msra.mxu0 %v889
        %907 = vmatprep.subr.mxu0 0.0
        %908 = vmatpush1.msra.mxu0 %v888
        %909 = vmatprep.subr.mxu0 0.0
        %910 = vmatpush1.msra.mxu0 %v887
        %911 = vmatprep.subr.mxu0 0.0
        %912 = vmatpush1.msra.mxu0 %v886
        %913 = vmatprep.subr.mxu0 0.0
        %914 = vmatpush1.msra.mxu0 %v885
        %915 = vmatprep.subr.mxu0 0.0
        %916 = vmatpush1.msra.mxu0 %v884
        %917 = vmatprep.subr.mxu0 0.0
        %918 = vmatpush1.msra.mxu0 %v883
        %919 = vmatprep.subr.mxu0 0.0
        %920 = vmatpush1.msra.mxu0 %v882
        %921 = vmatprep.subr.mxu0 0.0
        %922 = vmatpush1.msra.mxu0 %v881
        %923 = vmatprep.subr.mxu0 0.0
        %924 = vmatpush1.msra.mxu0 %v880
        %925 = vmatprep.subr.mxu0 0.0
        %926 = vmatpush1.msra.mxu0 %v879
        %927 = vmatprep.subr.mxu0 0.0
        %928 = vmatpush2.msra.mxu0 0.0
        %929 = vmatprep.subr.mxu0 0.0
        %930 = vmatpush2.msra.mxu0 0.0
        %931 = vmatprep.subr.mxu0 0.0
        %932 = vmatpush2.msra.mxu0 0.0
        %933 = vmatprep.subr.mxu0 0.0
        %934 = vmatpush2.msra.mxu0 0.0
        %935 = vmatprep.subr.mxu0 0.0
        %936 = vmatpush2.msra.mxu0 0.0
        %937 = vmatprep.subr.mxu0 0.0
        %938 = vmatpush2.msra.mxu0 0.0
        %939 = vmatprep.subr.mxu0 0.0
        %940 = vmatpush2.msra.mxu0 0.0
        %941 = vmatprep.subr.mxu0 0.0
        %942 = vmatpush2.msra.mxu0 0.0
        %943 = vmatprep.subr.mxu0 0.0
        %944 = vmatpush2.msra.mxu0 0.0
        %945 = vmatprep.subr.mxu0 0.0
        %946 = vmatpush2.msra.mxu0 0.0
        %947 = vmatprep.subr.mxu0 0.0
        %948 = vmatpush2.msra.mxu0 0.0
        %949 = vmatprep.subr.mxu0 0.0
        %950 = vmatpush2.msra.mxu0 0.0
        %951 = vmatprep.subr.mxu0 0.0
        %952 = vmatpush2.msra.mxu0 0.0
        %953 = vmatprep.subr.mxu0 0.0
        %954 = vmatpush2.msra.mxu0 0.0
        %955 = vmatprep.subr.mxu0 0.0
        %956 = vmatpush2.msra.mxu0 0.0
        %957 = vmatprep.subr.mxu0 0.0
        %958 = vmatpush2.msra.mxu0 0.0
        %959 = vmatprep.mubr.f32.mxu0 0.0
        %960 = vmatmul.mubr.f32.gmra.mxu0 %v862
        %v961 = vpop.f32.mrf.mxu0
        %v962 = vadd.f32 0.0, %v961
        %v963 = vpop.f32.mrf.mxu0
        %964 = vmatprep.mubr.f32.mxu0 0.0
        %965 = vmatmul.mubr.f32.gmra.mxu0 %v863
        %v966 = vpop.f32.mrf.mxu0
        %v967 = vadd.f32 0.0, %v966
        %v968 = vpop.f32.mrf.mxu0
        %969 = vmatprep.mubr.f32.mxu0 0.0
        %970 = vmatmul.mubr.f32.gmra.mxu0 %v864
        %v971 = vpop.f32.mrf.mxu0
        %v972 = vadd.f32 0.0, %v971
        %v973 = vpop.f32.mrf.mxu0
        %974 = vmatprep.mubr.f32.mxu0 0.0
        %975 = vmatmul.mubr.f32.gmra.mxu0 %v865
        %v976 = vpop.f32.mrf.mxu0
        %v977 = vadd.f32 0.0, %v976
        %v978 = vpop.f32.mrf.mxu0
        %979 = vmatprep.mubr.f32.mxu0 0.0
        %980 = vmatmul.mubr.f32.gmra.mxu0 %v866
        %v981 = vpop.f32.mrf.mxu0
        %v982 = vadd.f32 0.0, %v981
        %v983 = vpop.f32.mrf.mxu0
        %984 = vmatprep.mubr.f32.mxu0 0.0
        %985 = vmatmul.mubr.f32.gmra.mxu0 %v867
        %v986 = vpop.f32.mrf.mxu0
        %v987 = vadd.f32 0.0, %v986
        %v988 = vpop.f32.mrf.mxu0
        %989 = vmatprep.mubr.f32.mxu0 0.0
        %990 = vmatmul.mubr.f32.gmra.mxu0 %v868
        %v991 = vpop.f32.mrf.mxu0
        %v992 = vadd.f32 0.0, %v991
        %v993 = vpop.f32.mrf.mxu0
        %994 = vmatprep.mubr.f32.mxu0 0.0
        %995 = vmatmul.mubr.f32.gmra.mxu0 %v869
        %v996 = vpop.f32.mrf.mxu0
        %v997 = vadd.f32 0.0, %v996
        %v998 = vpop.f32.mrf.mxu0
        %999 = vmatprep.mubr.f32.mxu0 0.0
        %1000 = vmatmul.mubr.f32.gmra.mxu0 %v870
        %v1001 = vpop.f32.mrf.mxu0
        %v1002 = vadd.f32 0.0, %v1001
        %v1003 = vpop.f32.mrf.mxu0
        %1004 = vmatprep.mubr.f32.mxu0 0.0
        %1005 = vmatmul.mubr.f32.gmra.mxu0 %v871
        %v1006 = vpop.f32.mrf.mxu0
        %v1007 = vadd.f32 0.0, %v1006
        %v1008 = vpop.f32.mrf.mxu0
        %1009 = vmatprep.mubr.f32.mxu0 0.0
        %1010 = vmatmul.mubr.f32.gmra.mxu0 %v872
        %v1011 = vpop.f32.mrf.mxu0
        %v1012 = vadd.f32 0.0, %v1011
        %v1013 = vpop.f32.mrf.mxu0
        %1014 = vmatprep.mubr.f32.mxu0 0.0
        %1015 = vmatmul.mubr.f32.gmra.mxu0 %v873
        %v1016 = vpop.f32.mrf.mxu0
        %v1017 = vadd.f32 0.0, %v1016
        %v1018 = vpop.f32.mrf.mxu0
        %1019 = vmatprep.mubr.f32.mxu0 0.0
        %1020 = vmatmul.mubr.f32.gmra.mxu0 %v874
        %v1021 = vpop.f32.mrf.mxu0
        %v1022 = vadd.f32 0.0, %v1021
        %v1023 = vpop.f32.mrf.mxu0
        %1024 = vmatprep.mubr.f32.mxu0 0.0
        %1025 = vmatmul.mubr.f32.gmra.mxu0 %v875
        %v1026 = vpop.f32.mrf.mxu0
        %v1027 = vadd.f32 0.0, %v1026
        %v1028 = vpop.f32.mrf.mxu0
        %1029 = vmatprep.mubr.f32.mxu0 0.0
        %1030 = vmatmul.mubr.f32.gmra.mxu0 %v876
        %v1031 = vpop.f32.mrf.mxu0
        %v1032 = vadd.f32 0.0, %v1031
        %v1033 = vpop.f32.mrf.mxu0
        %1034 = vmatprep.mubr.f32.mxu0 0.0
        %1035 = vmatmul.mubr.f32.gmra.mxu0 %v877
        %v1036 = vpop.f32.mrf.mxu0
        %v1037 = vadd.f32 0.0, %v1036
        %v1038 = vpop.f32.mrf.mxu0
        %1039 = vdwg.mxu0
        %v1040 = vld [vmem:[#allocation2] sm:$0xff]
        %v1041 = vld [vmem:[#allocation2 + $0x8] sm:$0xff]
        %v1042 = vld [vmem:[#allocation2 + $0x10] sm:$0xff]
        %v1043 = vld [vmem:[#allocation2 + $0x18] sm:$0xff]
        %v1044 = vld [vmem:[#allocation2 + $0x20] sm:$0xff]
        %v1045 = vld [vmem:[#allocation2 + $0x28] sm:$0xff]
        %v1046 = vld [vmem:[#allocation2 + $0x30] sm:$0xff]
        %v1047 = vld [vmem:[#allocation2 + $0x38] sm:$0xff]
        %v1048 = vld [vmem:[#allocation2 + $0x40] sm:$0xff]
        %v1049 = vld [vmem:[#allocation2 + $0x48] sm:$0xff]
        %v1050 = vld [vmem:[#allocation2 + $0x50] sm:$0xff]
        %v1051 = vld [vmem:[#allocation2 + $0x58] sm:$0xff]
        %v1052 = vld [vmem:[#allocation2 + $0x60] sm:$0xff]
        %v1053 = vld [vmem:[#allocation2 + $0x68] sm:$0xff]
        %v1054 = vld [vmem:[#allocation2 + $0x70] sm:$0xff]
        %v1055 = vld [vmem:[#allocation2 + $0x78] sm:$0xff]
        %v1056 = vadd.f32 %v1040, %v962
        %v1057 = vadd.f32 %v1041, %v967
        %v1058 = vadd.f32 %v1042, %v972
        %v1059 = vadd.f32 %v1043, %v977
        %v1060 = vadd.f32 %v1044, %v982
        %v1061 = vadd.f32 %v1045, %v987
        %v1062 = vadd.f32 %v1046, %v992
        %v1063 = vadd.f32 %v1047, %v997
        %v1064 = vadd.f32 %v1048, %v1002
        %v1065 = vadd.f32 %v1049, %v1007
        %v1066 = vadd.f32 %v1050, %v1012
        %v1067 = vadd.f32 %v1051, %v1017
        %v1068 = vadd.f32 %v1052, %v1022
        %v1069 = vadd.f32 %v1053, %v1027
        %v1070 = vadd.f32 %v1054, %v1032
        %v1071 = vadd.f32 %v1055, %v1037
        %1072 = vst [vmem:[#allocation2] sm:$0xff] %v1056
        %1073 = vst [vmem:[#allocation2 + $0x8] sm:$0xff] %v1057
        %1074 = vst [vmem:[#allocation2 + $0x10] sm:$0xff] %v1058
        %1075 = vst [vmem:[#allocation2 + $0x18] sm:$0xff] %v1059
        %1076 = vst [vmem:[#allocation2 + $0x20] sm:$0xff] %v1060
        %1077 = vst [vmem:[#allocation2 + $0x28] sm:$0xff] %v1061
        %1078 = vst [vmem:[#allocation2 + $0x30] sm:$0xff] %v1062
        %1079 = vst [vmem:[#allocation2 + $0x38] sm:$0xff] %v1063
        %1080 = vst [vmem:[#allocation2 + $0x40] sm:$0xff] %v1064
        %1081 = vst [vmem:[#allocation2 + $0x48] sm:$0xff] %v1065
        %1082 = vst [vmem:[#allocation2 + $0x50] sm:$0xff] %v1066
        %1083 = vst [vmem:[#allocation2 + $0x58] sm:$0xff] %v1067
        %1084 = vst [vmem:[#allocation2 + $0x60] sm:$0xff] %v1068
        %1085 = vst [vmem:[#allocation2 + $0x68] sm:$0xff] %v1069
        %1086 = vst [vmem:[#allocation2 + $0x70] sm:$0xff] %v1070
        %1087 = vst [vmem:[#allocation2 + $0x78] sm:$0xff] %v1071
        %v1088 = vld [vmem:[%s861 + $0x1] sm:$0xff]
        %v1089 = vld [vmem:[%s861 + $0x9] sm:$0xff]
        %v1090 = vld [vmem:[%s861 + $0x19] sm:$0xff]
        %v1091 = vld [vmem:[%s861 + $0x21] sm:$0xff]
        %v1092 = vld [vmem:[%s861 + $0x31] sm:$0xff]
        %v1093 = vld [vmem:[%s861 + $0x39] sm:$0xff]
        %v1094 = vld [vmem:[%s861 + $0x49] sm:$0xff]
        %v1095 = vld [vmem:[%s861 + $0x51] sm:$0xff]
        %v1096 = vld [vmem:[%s861 + $0x61] sm:$0xff]
        %v1097 = vld [vmem:[%s861 + $0x69] sm:$0xff]
        %v1098 = vld [vmem:[%s861 + $0x79] sm:$0xff]
        %v1099 = vld [vmem:[%s861 + $0x81] sm:$0xff]
        %v1100 = vld [vmem:[%s861 + $0x91] sm:$0xff]
        %v1101 = vld [vmem:[%s861 + $0x99] sm:$0xff]
        %v1102 = vld [vmem:[%s861 + $0xa9] sm:$0xff]
        %v1103 = vld [vmem:[%s861 + $0xb1] sm:$0xff]
        %s1104 = scalar_lea.vmem %s1, 512
        %v1105 = vld [vmem:[%s1104] sm:$0xff]
        %v1106 = vld [vmem:[%s1104 + $0x8] sm:$0xff]
        %v1107 = vld [vmem:[%s1104 + $0x10] sm:$0xff]
        %v1108 = vld [vmem:[%s1104 + $0x18] sm:$0xff]
        %v1109 = vld [vmem:[%s1104 + $0x20] sm:$0xff]
        %v1110 = vld [vmem:[%s1104 + $0x28] sm:$0xff]
        %v1111 = vld [vmem:[%s1104 + $0x30] sm:$0xff]
        %v1112 = vld [vmem:[%s1104 + $0x38] sm:$0xff]
        %v1113 = vld [vmem:[%s1104 + $0x40] sm:$0xff]
        %v1114 = vld [vmem:[%s1104 + $0x48] sm:$0xff]
        %v1115 = vld [vmem:[%s1104 + $0x50] sm:$0xff]
        %v1116 = vld [vmem:[%s1104 + $0x58] sm:$0xff]
        %v1117 = vld [vmem:[%s1104 + $0x60] sm:$0xff]
        %v1118 = vld [vmem:[%s1104 + $0x68] sm:$0xff]
        %v1119 = vld [vmem:[%s1104 + $0x70] sm:$0xff]
        %v1120 = vld [vmem:[%s1104 + $0x78] sm:$0xff]
        %1121 = vmatprep.subr.mxu0 0.0
        %1122 = vmatpush1.msra.mxu0 %v1120
        %1123 = vmatprep.subr.mxu0 0.0
        %1124 = vmatpush1.msra.mxu0 %v1119
        %1125 = vmatprep.subr.mxu0 0.0
        %1126 = vmatpush1.msra.mxu0 %v1118
        %1127 = vmatprep.subr.mxu0 0.0
        %1128 = vmatpush1.msra.mxu0 %v1117
        %1129 = vmatprep.subr.mxu0 0.0
        %1130 = vmatpush1.msra.mxu0 %v1116
        %1131 = vmatprep.subr.mxu0 0.0
        %1132 = vmatpush1.msra.mxu0 %v1115
        %1133 = vmatprep.subr.mxu0 0.0
        %1134 = vmatpush1.msra.mxu0 %v1114
        %1135 = vmatprep.subr.mxu0 0.0
        %1136 = vmatpush1.msra.mxu0 %v1113
        %1137 = vmatprep.subr.mxu0 0.0
        %1138 = vmatpush1.msra.mxu0 %v1112
        %1139 = vmatprep.subr.mxu0 0.0
        %1140 = vmatpush1.msra.mxu0 %v1111
        %1141 = vmatprep.subr.mxu0 0.0
        %1142 = vmatpush1.msra.mxu0 %v1110
        %1143 = vmatprep.subr.mxu0 0.0
        %1144 = vmatpush1.msra.mxu0 %v1109
        %1145 = vmatprep.subr.mxu0 0.0
        %1146 = vmatpush1.msra.mxu0 %v1108
        %1147 = vmatprep.subr.mxu0 0.0
        %1148 = vmatpush1.msra.mxu0 %v1107
        %1149 = vmatprep.subr.mxu0 0.0
        %1150 = vmatpush1.msra.mxu0 %v1106
        %1151 = vmatprep.subr.mxu0 0.0
        %1152 = vmatpush1.msra.mxu0 %v1105
        %1153 = vmatprep.subr.mxu0 0.0
        %1154 = vmatpush2.msra.mxu0 0.0
        %1155 = vmatprep.subr.mxu0 0.0
        %1156 = vmatpush2.msra.mxu0 0.0
        %1157 = vmatprep.subr.mxu0 0.0
        %1158 = vmatpush2.msra.mxu0 0.0
        %1159 = vmatprep.subr.mxu0 0.0
        %1160 = vmatpush2.msra.mxu0 0.0
        %1161 = vmatprep.subr.mxu0 0.0
        %1162 = vmatpush2.msra.mxu0 0.0
        %1163 = vmatprep.subr.mxu0 0.0
        %1164 = vmatpush2.msra.mxu0 0.0
        %1165 = vmatprep.subr.mxu0 0.0
        %1166 = vmatpush2.msra.mxu0 0.0
        %1167 = vmatprep.subr.mxu0 0.0
        %1168 = vmatpush2.msra.mxu0 0.0
        %1169 = vmatprep.subr.mxu0 0.0
        %1170 = vmatpush2.msra.mxu0 0.0
        %1171 = vmatprep.subr.mxu0 0.0
        %1172 = vmatpush2.msra.mxu0 0.0
        %1173 = vmatprep.subr.mxu0 0.0
        %1174 = vmatpush2.msra.mxu0 0.0
        %1175 = vmatprep.subr.mxu0 0.0
        %1176 = vmatpush2.msra.mxu0 0.0
        %1177 = vmatprep.subr.mxu0 0.0
        %1178 = vmatpush2.msra.mxu0 0.0
        %1179 = vmatprep.subr.mxu0 0.0
        %1180 = vmatpush2.msra.mxu0 0.0
        %1181 = vmatprep.subr.mxu0 0.0
        %1182 = vmatpush2.msra.mxu0 0.0
        %1183 = vmatprep.subr.mxu0 0.0
        %1184 = vmatpush2.msra.mxu0 0.0
        %1185 = vmatprep.mubr.f32.mxu0 0.0
        %1186 = vmatmul.mubr.f32.gmra.mxu0 %v1088
        %v1187 = vpop.f32.mrf.mxu0
        %v1188 = vadd.f32 0.0, %v1187
        %v1189 = vpop.f32.mrf.mxu0
        %1190 = vmatprep.mubr.f32.mxu0 0.0
        %1191 = vmatmul.mubr.f32.gmra.mxu0 %v1089
        %v1192 = vpop.f32.mrf.mxu0
        %v1193 = vadd.f32 0.0, %v1192
        %v1194 = vpop.f32.mrf.mxu0
        %1195 = vmatprep.mubr.f32.mxu0 0.0
        %1196 = vmatmul.mubr.f32.gmra.mxu0 %v1090
        %v1197 = vpop.f32.mrf.mxu0
        %v1198 = vadd.f32 0.0, %v1197
        %v1199 = vpop.f32.mrf.mxu0
        %1200 = vmatprep.mubr.f32.mxu0 0.0
        %1201 = vmatmul.mubr.f32.gmra.mxu0 %v1091
        %v1202 = vpop.f32.mrf.mxu0
        %v1203 = vadd.f32 0.0, %v1202
        %v1204 = vpop.f32.mrf.mxu0
        %1205 = vmatprep.mubr.f32.mxu0 0.0
        %1206 = vmatmul.mubr.f32.gmra.mxu0 %v1092
        %v1207 = vpop.f32.mrf.mxu0
        %v1208 = vadd.f32 0.0, %v1207
        %v1209 = vpop.f32.mrf.mxu0
        %1210 = vmatprep.mubr.f32.mxu0 0.0
        %1211 = vmatmul.mubr.f32.gmra.mxu0 %v1093
        %v1212 = vpop.f32.mrf.mxu0
        %v1213 = vadd.f32 0.0, %v1212
        %v1214 = vpop.f32.mrf.mxu0
        %1215 = vmatprep.mubr.f32.mxu0 0.0
        %1216 = vmatmul.mubr.f32.gmra.mxu0 %v1094
        %v1217 = vpop.f32.mrf.mxu0
        %v1218 = vadd.f32 0.0, %v1217
        %v1219 = vpop.f32.mrf.mxu0
        %1220 = vmatprep.mubr.f32.mxu0 0.0
        %1221 = vmatmul.mubr.f32.gmra.mxu0 %v1095
        %v1222 = vpop.f32.mrf.mxu0
        %v1223 = vadd.f32 0.0, %v1222
        %v1224 = vpop.f32.mrf.mxu0
        %1225 = vmatprep.mubr.f32.mxu0 0.0
        %1226 = vmatmul.mubr.f32.gmra.mxu0 %v1096
        %v1227 = vpop.f32.mrf.mxu0
        %v1228 = vadd.f32 0.0, %v1227
        %v1229 = vpop.f32.mrf.mxu0
        %1230 = vmatprep.mubr.f32.mxu0 0.0
        %1231 = vmatmul.mubr.f32.gmra.mxu0 %v1097
        %v1232 = vpop.f32.mrf.mxu0
        %v1233 = vadd.f32 0.0, %v1232
        %v1234 = vpop.f32.mrf.mxu0
        %1235 = vmatprep.mubr.f32.mxu0 0.0
        %1236 = vmatmul.mubr.f32.gmra.mxu0 %v1098
        %v1237 = vpop.f32.mrf.mxu0
        %v1238 = vadd.f32 0.0, %v1237
        %v1239 = vpop.f32.mrf.mxu0
        %1240 = vmatprep.mubr.f32.mxu0 0.0
        %1241 = vmatmul.mubr.f32.gmra.mxu0 %v1099
        %v1242 = vpop.f32.mrf.mxu0
        %v1243 = vadd.f32 0.0, %v1242
        %v1244 = vpop.f32.mrf.mxu0
        %1245 = vmatprep.mubr.f32.mxu0 0.0
        %1246 = vmatmul.mubr.f32.gmra.mxu0 %v1100
        %v1247 = vpop.f32.mrf.mxu0
        %v1248 = vadd.f32 0.0, %v1247
        %v1249 = vpop.f32.mrf.mxu0
        %1250 = vmatprep.mubr.f32.mxu0 0.0
        %1251 = vmatmul.mubr.f32.gmra.mxu0 %v1101
        %v1252 = vpop.f32.mrf.mxu0
        %v1253 = vadd.f32 0.0, %v1252
        %v1254 = vpop.f32.mrf.mxu0
        %1255 = vmatprep.mubr.f32.mxu0 0.0
        %1256 = vmatmul.mubr.f32.gmra.mxu0 %v1102
        %v1257 = vpop.f32.mrf.mxu0
        %v1258 = vadd.f32 0.0, %v1257
        %v1259 = vpop.f32.mrf.mxu0
        %1260 = vmatprep.mubr.f32.mxu0 0.0
        %1261 = vmatmul.mubr.f32.gmra.mxu0 %v1103
        %v1262 = vpop.f32.mrf.mxu0
        %v1263 = vadd.f32 0.0, %v1262
        %v1264 = vpop.f32.mrf.mxu0
        %1265 = vdwg.mxu0
        %v1266 = vld [vmem:[#allocation2] sm:$0xff]
        %v1267 = vld [vmem:[#allocation2 + $0x8] sm:$0xff]
        %v1268 = vld [vmem:[#allocation2 + $0x10] sm:$0xff]
        %v1269 = vld [vmem:[#allocation2 + $0x18] sm:$0xff]
        %v1270 = vld [vmem:[#allocation2 + $0x20] sm:$0xff]
        %v1271 = vld [vmem:[#allocation2 + $0x28] sm:$0xff]
        %v1272 = vld [vmem:[#allocation2 + $0x30] sm:$0xff]
        %v1273 = vld [vmem:[#allocation2 + $0x38] sm:$0xff]
        %v1274 = vld [vmem:[#allocation2 + $0x40] sm:$0xff]
        %v1275 = vld [vmem:[#allocation2 + $0x48] sm:$0xff]
        %v1276 = vld [vmem:[#allocation2 + $0x50] sm:$0xff]
        %v1277 = vld [vmem:[#allocation2 + $0x58] sm:$0xff]
        %v1278 = vld [vmem:[#allocation2 + $0x60] sm:$0xff]
        %v1279 = vld [vmem:[#allocation2 + $0x68] sm:$0xff]
        %v1280 = vld [vmem:[#allocation2 + $0x70] sm:$0xff]
        %v1281 = vld [vmem:[#allocation2 + $0x78] sm:$0xff]
        %v1282 = vadd.f32 %v1266, %v1188
        %v1283 = vadd.f32 %v1267, %v1193
        %v1284 = vadd.f32 %v1268, %v1198
        %v1285 = vadd.f32 %v1269, %v1203
        %v1286 = vadd.f32 %v1270, %v1208
        %v1287 = vadd.f32 %v1271, %v1213
        %v1288 = vadd.f32 %v1272, %v1218
        %v1289 = vadd.f32 %v1273, %v1223
        %v1290 = vadd.f32 %v1274, %v1228
        %v1291 = vadd.f32 %v1275, %v1233
        %v1292 = vadd.f32 %v1276, %v1238
        %v1293 = vadd.f32 %v1277, %v1243
        %v1294 = vadd.f32 %v1278, %v1248
        %v1295 = vadd.f32 %v1279, %v1253
        %v1296 = vadd.f32 %v1280, %v1258
        %v1297 = vadd.f32 %v1281, %v1263
        %1298 = vst [vmem:[#allocation2] sm:$0xff] %v1282
        %1299 = vst [vmem:[#allocation2 + $0x8] sm:$0xff] %v1283
        %1300 = vst [vmem:[#allocation2 + $0x10] sm:$0xff] %v1284
        %1301 = vst [vmem:[#allocation2 + $0x18] sm:$0xff] %v1285
        %1302 = vst [vmem:[#allocation2 + $0x20] sm:$0xff] %v1286
        %1303 = vst [vmem:[#allocation2 + $0x28] sm:$0xff] %v1287
        %1304 = vst [vmem:[#allocation2 + $0x30] sm:$0xff] %v1288
        %1305 = vst [vmem:[#allocation2 + $0x38] sm:$0xff] %v1289
        %1306 = vst [vmem:[#allocation2 + $0x40] sm:$0xff] %v1290
        %1307 = vst [vmem:[#allocation2 + $0x48] sm:$0xff] %v1291
        %1308 = vst [vmem:[#allocation2 + $0x50] sm:$0xff] %v1292
        %1309 = vst [vmem:[#allocation2 + $0x58] sm:$0xff] %v1293
        %1310 = vst [vmem:[#allocation2 + $0x60] sm:$0xff] %v1294
        %1311 = vst [vmem:[#allocation2 + $0x68] sm:$0xff] %v1295
        %1312 = vst [vmem:[#allocation2 + $0x70] sm:$0xff] %v1296
        %1313 = vst [vmem:[#allocation2 + $0x78] sm:$0xff] %v1297
        %v1314 = vld [vmem:[%s861 + $0x2] sm:$0xff]
        %v1315 = vld [vmem:[%s861 + $0xa] sm:$0xff]
        %v1316 = vld [vmem:[%s861 + $0x1a] sm:$0xff]
        %v1317 = vld [vmem:[%s861 + $0x22] sm:$0xff]
        %v1318 = vld [vmem:[%s861 + $0x32] sm:$0xff]
        %v1319 = vld [vmem:[%s861 + $0x3a] sm:$0xff]
        %v1320 = vld [vmem:[%s861 + $0x4a] sm:$0xff]
        %v1321 = vld [vmem:[%s861 + $0x52] sm:$0xff]
        %v1322 = vld [vmem:[%s861 + $0x62] sm:$0xff]
        %v1323 = vld [vmem:[%s861 + $0x6a] sm:$0xff]
        %v1324 = vld [vmem:[%s861 + $0x7a] sm:$0xff]
        %v1325 = vld [vmem:[%s861 + $0x82] sm:$0xff]
        %v1326 = vld [vmem:[%s861 + $0x92] sm:$0xff]
        %v1327 = vld [vmem:[%s861 + $0x9a] sm:$0xff]
        %v1328 = vld [vmem:[%s861 + $0xaa] sm:$0xff]
        %v1329 = vld [vmem:[%s861 + $0xb2] sm:$0xff]
        %s1330 = scalar_lea.vmem %s1, 640
        %v1331 = vld [vmem:[%s1330] sm:$0xff]
        %v1332 = vld [vmem:[%s1330 + $0x8] sm:$0xff]
        %v1333 = vld [vmem:[%s1330 + $0x10] sm:$0xff]
        %v1334 = vld [vmem:[%s1330 + $0x18] sm:$0xff]
        %v1335 = vld [vmem:[%s1330 + $0x20] sm:$0xff]
        %v1336 = vld [vmem:[%s1330 + $0x28] sm:$0xff]
        %v1337 = vld [vmem:[%s1330 + $0x30] sm:$0xff]
        %v1338 = vld [vmem:[%s1330 + $0x38] sm:$0xff]
        %v1339 = vld [vmem:[%s1330 + $0x40] sm:$0xff]
        %v1340 = vld [vmem:[%s1330 + $0x48] sm:$0xff]
        %v1341 = vld [vmem:[%s1330 + $0x50] sm:$0xff]
        %v1342 = vld [vmem:[%s1330 + $0x58] sm:$0xff]
        %v1343 = vld [vmem:[%s1330 + $0x60] sm:$0xff]
        %v1344 = vld [vmem:[%s1330 + $0x68] sm:$0xff]
        %v1345 = vld [vmem:[%s1330 + $0x70] sm:$0xff]
        %v1346 = vld [vmem:[%s1330 + $0x78] sm:$0xff]
        %1347 = vmatprep.subr.mxu0 0.0
        %1348 = vmatpush1.msra.mxu0 %v1346
        %1349 = vmatprep.subr.mxu0 0.0
        %1350 = vmatpush1.msra.mxu0 %v1345
        %1351 = vmatprep.subr.mxu0 0.0
        %1352 = vmatpush1.msra.mxu0 %v1344
        %1353 = vmatprep.subr.mxu0 0.0
        %1354 = vmatpush1.msra.mxu0 %v1343
        %1355 = vmatprep.subr.mxu0 0.0
        %1356 = vmatpush1.msra.mxu0 %v1342
        %1357 = vmatprep.subr.mxu0 0.0
        %1358 = vmatpush1.msra.mxu0 %v1341
        %1359 = vmatprep.subr.mxu0 0.0
        %1360 = vmatpush1.msra.mxu0 %v1340
        %1361 = vmatprep.subr.mxu0 0.0
        %1362 = vmatpush1.msra.mxu0 %v1339
        %1363 = vmatprep.subr.mxu0 0.0
        %1364 = vmatpush1.msra.mxu0 %v1338
        %1365 = vmatprep.subr.mxu0 0.0
        %1366 = vmatpush1.msra.mxu0 %v1337
        %1367 = vmatprep.subr.mxu0 0.0
        %1368 = vmatpush1.msra.mxu0 %v1336
        %1369 = vmatprep.subr.mxu0 0.0
        %1370 = vmatpush1.msra.mxu0 %v1335
        %1371 = vmatprep.subr.mxu0 0.0
        %1372 = vmatpush1.msra.mxu0 %v1334
        %1373 = vmatprep.subr.mxu0 0.0
        %1374 = vmatpush1.msra.mxu0 %v1333
        %1375 = vmatprep.subr.mxu0 0.0
        %1376 = vmatpush1.msra.mxu0 %v1332
        %1377 = vmatprep.subr.mxu0 0.0
        %1378 = vmatpush1.msra.mxu0 %v1331
        %1379 = vmatprep.subr.mxu0 0.0
        %1380 = vmatpush2.msra.mxu0 0.0
        %1381 = vmatprep.subr.mxu0 0.0
        %1382 = vmatpush2.msra.mxu0 0.0
        %1383 = vmatprep.subr.mxu0 0.0
        %1384 = vmatpush2.msra.mxu0 0.0
        %1385 = vmatprep.subr.mxu0 0.0
        %1386 = vmatpush2.msra.mxu0 0.0
        %1387 = vmatprep.subr.mxu0 0.0
        %1388 = vmatpush2.msra.mxu0 0.0
        %1389 = vmatprep.subr.mxu0 0.0
        %1390 = vmatpush2.msra.mxu0 0.0
        %1391 = vmatprep.subr.mxu0 0.0
        %1392 = vmatpush2.msra.mxu0 0.0
        %1393 = vmatprep.subr.mxu0 0.0
        %1394 = vmatpush2.msra.mxu0 0.0
        %1395 = vmatprep.subr.mxu0 0.0
        %1396 = vmatpush2.msra.mxu0 0.0
        %1397 = vmatprep.subr.mxu0 0.0
        %1398 = vmatpush2.msra.mxu0 0.0
        %1399 = vmatprep.subr.mxu0 0.0
        %1400 = vmatpush2.msra.mxu0 0.0
        %1401 = vmatprep.subr.mxu0 0.0
        %1402 = vmatpush2.msra.mxu0 0.0
        %1403 = vmatprep.subr.mxu0 0.0
        %1404 = vmatpush2.msra.mxu0 0.0
        %1405 = vmatprep.subr.mxu0 0.0
        %1406 = vmatpush2.msra.mxu0 0.0
        %1407 = vmatprep.subr.mxu0 0.0
        %1408 = vmatpush2.msra.mxu0 0.0
        %1409 = vmatprep.subr.mxu0 0.0
        %1410 = vmatpush2.msra.mxu0 0.0
        %1411 = vmatprep.mubr.f32.mxu0 0.0
        %1412 = vmatmul.mubr.f32.gmra.mxu0 %v1314
        %v1413 = vpop.f32.mrf.mxu0
        %v1414 = vadd.f32 0.0, %v1413
        %v1415 = vpop.f32.mrf.mxu0
        %1416 = vmatprep.mubr.f32.mxu0 0.0
        %1417 = vmatmul.mubr.f32.gmra.mxu0 %v1315
        %v1418 = vpop.f32.mrf.mxu0
        %v1419 = vadd.f32 0.0, %v1418
        %v1420 = vpop.f32.mrf.mxu0
        %1421 = vmatprep.mubr.f32.mxu0 0.0
        %1422 = vmatmul.mubr.f32.gmra.mxu0 %v1316
        %v1423 = vpop.f32.mrf.mxu0
        %v1424 = vadd.f32 0.0, %v1423
        %v1425 = vpop.f32.mrf.mxu0
        %1426 = vmatprep.mubr.f32.mxu0 0.0
        %1427 = vmatmul.mubr.f32.gmra.mxu0 %v1317
        %v1428 = vpop.f32.mrf.mxu0
        %v1429 = vadd.f32 0.0, %v1428
        %v1430 = vpop.f32.mrf.mxu0
        %1431 = vmatprep.mubr.f32.mxu0 0.0
        %1432 = vmatmul.mubr.f32.gmra.mxu0 %v1318
        %v1433 = vpop.f32.mrf.mxu0
        %v1434 = vadd.f32 0.0, %v1433
        %v1435 = vpop.f32.mrf.mxu0
        %1436 = vmatprep.mubr.f32.mxu0 0.0
        %1437 = vmatmul.mubr.f32.gmra.mxu0 %v1319
        %v1438 = vpop.f32.mrf.mxu0
        %v1439 = vadd.f32 0.0, %v1438
        %v1440 = vpop.f32.mrf.mxu0
        %1441 = vmatprep.mubr.f32.mxu0 0.0
        %1442 = vmatmul.mubr.f32.gmra.mxu0 %v1320
        %v1443 = vpop.f32.mrf.mxu0
        %v1444 = vadd.f32 0.0, %v1443
        %v1445 = vpop.f32.mrf.mxu0
        %1446 = vmatprep.mubr.f32.mxu0 0.0
        %1447 = vmatmul.mubr.f32.gmra.mxu0 %v1321
        %v1448 = vpop.f32.mrf.mxu0
        %v1449 = vadd.f32 0.0, %v1448
        %v1450 = vpop.f32.mrf.mxu0
        %1451 = vmatprep.mubr.f32.mxu0 0.0
        %1452 = vmatmul.mubr.f32.gmra.mxu0 %v1322
        %v1453 = vpop.f32.mrf.mxu0
        %v1454 = vadd.f32 0.0, %v1453
        %v1455 = vpop.f32.mrf.mxu0
        %1456 = vmatprep.mubr.f32.mxu0 0.0
        %1457 = vmatmul.mubr.f32.gmra.mxu0 %v1323
        %v1458 = vpop.f32.mrf.mxu0
        %v1459 = vadd.f32 0.0, %v1458
        %v1460 = vpop.f32.mrf.mxu0
        %1461 = vmatprep.mubr.f32.mxu0 0.0
        %1462 = vmatmul.mubr.f32.gmra.mxu0 %v1324
        %v1463 = vpop.f32.mrf.mxu0
        %v1464 = vadd.f32 0.0, %v1463
        %v1465 = vpop.f32.mrf.mxu0
        %1466 = vmatprep.mubr.f32.mxu0 0.0
        %1467 = vmatmul.mubr.f32.gmra.mxu0 %v1325
        %v1468 = vpop.f32.mrf.mxu0
        %v1469 = vadd.f32 0.0, %v1468
        %v1470 = vpop.f32.mrf.mxu0
        %1471 = vmatprep.mubr.f32.mxu0 0.0
        %1472 = vmatmul.mubr.f32.gmra.mxu0 %v1326
        %v1473 = vpop.f32.mrf.mxu0
        %v1474 = vadd.f32 0.0, %v1473
        %v1475 = vpop.f32.mrf.mxu0
        %1476 = vmatprep.mubr.f32.mxu0 0.0
        %1477 = vmatmul.mubr.f32.gmra.mxu0 %v1327
        %v1478 = vpop.f32.mrf.mxu0
        %v1479 = vadd.f32 0.0, %v1478
        %v1480 = vpop.f32.mrf.mxu0
        %1481 = vmatprep.mubr.f32.mxu0 0.0
        %1482 = vmatmul.mubr.f32.gmra.mxu0 %v1328
        %v1483 = vpop.f32.mrf.mxu0
        %v1484 = vadd.f32 0.0, %v1483
        %v1485 = vpop.f32.mrf.mxu0
        %1486 = vmatprep.mubr.f32.mxu0 0.0
        %1487 = vmatmul.mubr.f32.gmra.mxu0 %v1329
        %v1488 = vpop.f32.mrf.mxu0
        %v1489 = vadd.f32 0.0, %v1488
        %v1490 = vpop.f32.mrf.mxu0
        %1491 = vdwg.mxu0
        %v1492 = vld [vmem:[#allocation2] sm:$0xff]
        %v1493 = vld [vmem:[#allocation2 + $0x8] sm:$0xff]
        %v1494 = vld [vmem:[#allocation2 + $0x10] sm:$0xff]
        %v1495 = vld [vmem:[#allocation2 + $0x18] sm:$0xff]
        %v1496 = vld [vmem:[#allocation2 + $0x20] sm:$0xff]
        %v1497 = vld [vmem:[#allocation2 + $0x28] sm:$0xff]
        %v1498 = vld [vmem:[#allocation2 + $0x30] sm:$0xff]
        %v1499 = vld [vmem:[#allocation2 + $0x38] sm:$0xff]
        %v1500 = vld [vmem:[#allocation2 + $0x40] sm:$0xff]
        %v1501 = vld [vmem:[#allocation2 + $0x48] sm:$0xff]
        %v1502 = vld [vmem:[#allocation2 + $0x50] sm:$0xff]
        %v1503 = vld [vmem:[#allocation2 + $0x58] sm:$0xff]
        %v1504 = vld [vmem:[#allocation2 + $0x60] sm:$0xff]
        %v1505 = vld [vmem:[#allocation2 + $0x68] sm:$0xff]
        %v1506 = vld [vmem:[#allocation2 + $0x70] sm:$0xff]
        %v1507 = vld [vmem:[#allocation2 + $0x78] sm:$0xff]
        %v1508 = vadd.f32 %v1492, %v1414
        %v1509 = vadd.f32 %v1493, %v1419
        %v1510 = vadd.f32 %v1494, %v1424
        %v1511 = vadd.f32 %v1495, %v1429
        %v1512 = vadd.f32 %v1496, %v1434
        %v1513 = vadd.f32 %v1497, %v1439
        %v1514 = vadd.f32 %v1498, %v1444
        %v1515 = vadd.f32 %v1499, %v1449
        %v1516 = vadd.f32 %v1500, %v1454
        %v1517 = vadd.f32 %v1501, %v1459
        %v1518 = vadd.f32 %v1502, %v1464
        %v1519 = vadd.f32 %v1503, %v1469
        %v1520 = vadd.f32 %v1504, %v1474
        %v1521 = vadd.f32 %v1505, %v1479
        %v1522 = vadd.f32 %v1506, %v1484
        %v1523 = vadd.f32 %v1507, %v1489
        %1524 = vst [vmem:[#allocation2] sm:$0xff] %v1508
        %1525 = vst [vmem:[#allocation2 + $0x8] sm:$0xff] %v1509
        %1526 = vst [vmem:[#allocation2 + $0x10] sm:$0xff] %v1510
        %1527 = vst [vmem:[#allocation2 + $0x18] sm:$0xff] %v1511
        %1528 = vst [vmem:[#allocation2 + $0x20] sm:$0xff] %v1512
        %1529 = vst [vmem:[#allocation2 + $0x28] sm:$0xff] %v1513
        %1530 = vst [vmem:[#allocation2 + $0x30] sm:$0xff] %v1514
        %1531 = vst [vmem:[#allocation2 + $0x38] sm:$0xff] %v1515
        %1532 = vst [vmem:[#allocation2 + $0x40] sm:$0xff] %v1516
        %1533 = vst [vmem:[#allocation2 + $0x48] sm:$0xff] %v1517
        %1534 = vst [vmem:[#allocation2 + $0x50] sm:$0xff] %v1518
        %1535 = vst [vmem:[#allocation2 + $0x58] sm:$0xff] %v1519
        %1536 = vst [vmem:[#allocation2 + $0x60] sm:$0xff] %v1520
        %1537 = vst [vmem:[#allocation2 + $0x68] sm:$0xff] %v1521
        %1538 = vst [vmem:[#allocation2 + $0x70] sm:$0xff] %v1522
        %1539 = vst [vmem:[#allocation2 + $0x78] sm:$0xff] %v1523
        %s1540 = sadd.s32 %s211, 2
        %s1541 = smul.u32 %s1540, 24
        %s1542 = scalar_lea.vmem %s209, %s1541
        %v1543 = vld [vmem:[%s1542] sm:$0xff]
        %v1544 = vld [vmem:[%s1542 + $0x8] sm:$0xff]
        %v1545 = vld [vmem:[%s1542 + $0x18] sm:$0xff]
        %v1546 = vld [vmem:[%s1542 + $0x20] sm:$0xff]
        %v1547 = vld [vmem:[%s1542 + $0x30] sm:$0xff]
        %v1548 = vld [vmem:[%s1542 + $0x38] sm:$0xff]
        %v1549 = vld [vmem:[%s1542 + $0x48] sm:$0xff]
        %v1550 = vld [vmem:[%s1542 + $0x50] sm:$0xff]
        %v1551 = vld [vmem:[%s1542 + $0x60] sm:$0xff]
        %v1552 = vld [vmem:[%s1542 + $0x68] sm:$0xff]
        %v1553 = vld [vmem:[%s1542 + $0x78] sm:$0xff]
        %v1554 = vld [vmem:[%s1542 + $0x80] sm:$0xff]
        %v1555 = vld [vmem:[%s1542 + $0x90] sm:$0xff]
        %v1556 = vld [vmem:[%s1542 + $0x98] sm:$0xff]
        %v1557 = vld [vmem:[%s1542 + $0xa8] sm:$0xff]
        %v1558 = vld [vmem:[%s1542 + $0xb0] sm:$0xff]
        %s1559 = scalar_lea.vmem %s1, 768
        %v1560 = vld [vmem:[%s1559] sm:$0xff]
        %v1561 = vld [vmem:[%s1559 + $0x8] sm:$0xff]
        %v1562 = vld [vmem:[%s1559 + $0x10] sm:$0xff]
        %v1563 = vld [vmem:[%s1559 + $0x18] sm:$0xff]
        %v1564 = vld [vmem:[%s1559 + $0x20] sm:$0xff]
        %v1565 = vld [vmem:[%s1559 + $0x28] sm:$0xff]
        %v1566 = vld [vmem:[%s1559 + $0x30] sm:$0xff]
        %v1567 = vld [vmem:[%s1559 + $0x38] sm:$0xff]
        %v1568 = vld [vmem:[%s1559 + $0x40] sm:$0xff]
        %v1569 = vld [vmem:[%s1559 + $0x48] sm:$0xff]
        %v1570 = vld [vmem:[%s1559 + $0x50] sm:$0xff]
        %v1571 = vld [vmem:[%s1559 + $0x58] sm:$0xff]
        %v1572 = vld [vmem:[%s1559 + $0x60] sm:$0xff]
        %v1573 = vld [vmem:[%s1559 + $0x68] sm:$0xff]
        %v1574 = vld [vmem:[%s1559 + $0x70] sm:$0xff]
        %v1575 = vld [vmem:[%s1559 + $0x78] sm:$0xff]
        %1576 = vmatprep.subr.mxu0 0.0
        %1577 = vmatpush1.msra.mxu0 %v1575
        %1578 = vmatprep.subr.mxu0 0.0
        %1579 = vmatpush1.msra.mxu0 %v1574
        %1580 = vmatprep.subr.mxu0 0.0
        %1581 = vmatpush1.msra.mxu0 %v1573
        %1582 = vmatprep.subr.mxu0 0.0
        %1583 = vmatpush1.msra.mxu0 %v1572
        %1584 = vmatprep.subr.mxu0 0.0
        %1585 = vmatpush1.msra.mxu0 %v1571
        %1586 = vmatprep.subr.mxu0 0.0
        %1587 = vmatpush1.msra.mxu0 %v1570
        %1588 = vmatprep.subr.mxu0 0.0
        %1589 = vmatpush1.msra.mxu0 %v1569
        %1590 = vmatprep.subr.mxu0 0.0
        %1591 = vmatpush1.msra.mxu0 %v1568
        %1592 = vmatprep.subr.mxu0 0.0
        %1593 = vmatpush1.msra.mxu0 %v1567
        %1594 = vmatprep.subr.mxu0 0.0
        %1595 = vmatpush1.msra.mxu0 %v1566
        %1596 = vmatprep.subr.mxu0 0.0
        %1597 = vmatpush1.msra.mxu0 %v1565
        %1598 = vmatprep.subr.mxu0 0.0
        %1599 = vmatpush1.msra.mxu0 %v1564
        %1600 = vmatprep.subr.mxu0 0.0
        %1601 = vmatpush1.msra.mxu0 %v1563
        %1602 = vmatprep.subr.mxu0 0.0
        %1603 = vmatpush1.msra.mxu0 %v1562
        %1604 = vmatprep.subr.mxu0 0.0
        %1605 = vmatpush1.msra.mxu0 %v1561
        %1606 = vmatprep.subr.mxu0 0.0
        %1607 = vmatpush1.msra.mxu0 %v1560
        %1608 = vmatprep.subr.mxu0 0.0
        %1609 = vmatpush2.msra.mxu0 0.0
        %1610 = vmatprep.subr.mxu0 0.0
        %1611 = vmatpush2.msra.mxu0 0.0
        %1612 = vmatprep.subr.mxu0 0.0
        %1613 = vmatpush2.msra.mxu0 0.0
        %1614 = vmatprep.subr.mxu0 0.0
        %1615 = vmatpush2.msra.mxu0 0.0
        %1616 = vmatprep.subr.mxu0 0.0
        %1617 = vmatpush2.msra.mxu0 0.0
        %1618 = vmatprep.subr.mxu0 0.0
        %1619 = vmatpush2.msra.mxu0 0.0
        %1620 = vmatprep.subr.mxu0 0.0
        %1621 = vmatpush2.msra.mxu0 0.0
        %1622 = vmatprep.subr.mxu0 0.0
        %1623 = vmatpush2.msra.mxu0 0.0
        %1624 = vmatprep.subr.mxu0 0.0
        %1625 = vmatpush2.msra.mxu0 0.0
        %1626 = vmatprep.subr.mxu0 0.0
        %1627 = vmatpush2.msra.mxu0 0.0
        %1628 = vmatprep.subr.mxu0 0.0
        %1629 = vmatpush2.msra.mxu0 0.0
        %1630 = vmatprep.subr.mxu0 0.0
        %1631 = vmatpush2.msra.mxu0 0.0
        %1632 = vmatprep.subr.mxu0 0.0
        %1633 = vmatpush2.msra.mxu0 0.0
        %1634 = vmatprep.subr.mxu0 0.0
        %1635 = vmatpush2.msra.mxu0 0.0
        %1636 = vmatprep.subr.mxu0 0.0
        %1637 = vmatpush2.msra.mxu0 0.0
        %1638 = vmatprep.subr.mxu0 0.0
        %1639 = vmatpush2.msra.mxu0 0.0
        %1640 = vmatprep.mubr.f32.mxu0 0.0
        %1641 = vmatmul.mubr.f32.gmra.mxu0 %v1543
        %v1642 = vpop.f32.mrf.mxu0
        %v1643 = vadd.f32 0.0, %v1642
        %v1644 = vpop.f32.mrf.mxu0
        %1645 = vmatprep.mubr.f32.mxu0 0.0
        %1646 = vmatmul.mubr.f32.gmra.mxu0 %v1544
        %v1647 = vpop.f32.mrf.mxu0
        %v1648 = vadd.f32 0.0, %v1647
        %v1649 = vpop.f32.mrf.mxu0
        %1650 = vmatprep.mubr.f32.mxu0 0.0
        %1651 = vmatmul.mubr.f32.gmra.mxu0 %v1545
        %v1652 = vpop.f32.mrf.mxu0
        %v1653 = vadd.f32 0.0, %v1652
        %v1654 = vpop.f32.mrf.mxu0
        %1655 = vmatprep.mubr.f32.mxu0 0.0
        %1656 = vmatmul.mubr.f32.gmra.mxu0 %v1546
        %v1657 = vpop.f32.mrf.mxu0
        %v1658 = vadd.f32 0.0, %v1657
        %v1659 = vpop.f32.mrf.mxu0
        %1660 = vmatprep.mubr.f32.mxu0 0.0
        %1661 = vmatmul.mubr.f32.gmra.mxu0 %v1547
        %v1662 = vpop.f32.mrf.mxu0
        %v1663 = vadd.f32 0.0, %v1662
        %v1664 = vpop.f32.mrf.mxu0
        %1665 = vmatprep.mubr.f32.mxu0 0.0
        %1666 = vmatmul.mubr.f32.gmra.mxu0 %v1548
        %v1667 = vpop.f32.mrf.mxu0
        %v1668 = vadd.f32 0.0, %v1667
        %v1669 = vpop.f32.mrf.mxu0
        %1670 = vmatprep.mubr.f32.mxu0 0.0
        %1671 = vmatmul.mubr.f32.gmra.mxu0 %v1549
        %v1672 = vpop.f32.mrf.mxu0
        %v1673 = vadd.f32 0.0, %v1672
        %v1674 = vpop.f32.mrf.mxu0
        %1675 = vmatprep.mubr.f32.mxu0 0.0
        %1676 = vmatmul.mubr.f32.gmra.mxu0 %v1550
        %v1677 = vpop.f32.mrf.mxu0
        %v1678 = vadd.f32 0.0, %v1677
        %v1679 = vpop.f32.mrf.mxu0
        %1680 = vmatprep.mubr.f32.mxu0 0.0
        %1681 = vmatmul.mubr.f32.gmra.mxu0 %v1551
        %v1682 = vpop.f32.mrf.mxu0
        %v1683 = vadd.f32 0.0, %v1682
        %v1684 = vpop.f32.mrf.mxu0
        %1685 = vmatprep.mubr.f32.mxu0 0.0
        %1686 = vmatmul.mubr.f32.gmra.mxu0 %v1552
        %v1687 = vpop.f32.mrf.mxu0
        %v1688 = vadd.f32 0.0, %v1687
        %v1689 = vpop.f32.mrf.mxu0
        %1690 = vmatprep.mubr.f32.mxu0 0.0
        %1691 = vmatmul.mubr.f32.gmra.mxu0 %v1553
        %v1692 = vpop.f32.mrf.mxu0
        %v1693 = vadd.f32 0.0, %v1692
        %v1694 = vpop.f32.mrf.mxu0
        %1695 = vmatprep.mubr.f32.mxu0 0.0
        %1696 = vmatmul.mubr.f32.gmra.mxu0 %v1554
        %v1697 = vpop.f32.mrf.mxu0
        %v1698 = vadd.f32 0.0, %v1697
        %v1699 = vpop.f32.mrf.mxu0
        %1700 = vmatprep.mubr.f32.mxu0 0.0
        %1701 = vmatmul.mubr.f32.gmra.mxu0 %v1555
        %v1702 = vpop.f32.mrf.mxu0
        %v1703 = vadd.f32 0.0, %v1702
        %v1704 = vpop.f32.mrf.mxu0
        %1705 = vmatprep.mubr.f32.mxu0 0.0
        %1706 = vmatmul.mubr.f32.gmra.mxu0 %v1556
        %v1707 = vpop.f32.mrf.mxu0
        %v1708 = vadd.f32 0.0, %v1707
        %v1709 = vpop.f32.mrf.mxu0
        %1710 = vmatprep.mubr.f32.mxu0 0.0
        %1711 = vmatmul.mubr.f32.gmra.mxu0 %v1557
        %v1712 = vpop.f32.mrf.mxu0
        %v1713 = vadd.f32 0.0, %v1712
        %v1714 = vpop.f32.mrf.mxu0
        %1715 = vmatprep.mubr.f32.mxu0 0.0
        %1716 = vmatmul.mubr.f32.gmra.mxu0 %v1558
        %v1717 = vpop.f32.mrf.mxu0
        %v1718 = vadd.f32 0.0, %v1717
        %v1719 = vpop.f32.mrf.mxu0
        %1720 = vdwg.mxu0
        %v1721 = vld [vmem:[#allocation2] sm:$0xff]
        %v1722 = vld [vmem:[#allocation2 + $0x8] sm:$0xff]
        %v1723 = vld [vmem:[#allocation2 + $0x10] sm:$0xff]
        %v1724 = vld [vmem:[#allocation2 + $0x18] sm:$0xff]
        %v1725 = vld [vmem:[#allocation2 + $0x20] sm:$0xff]
        %v1726 = vld [vmem:[#allocation2 + $0x28] sm:$0xff]
        %v1727 = vld [vmem:[#allocation2 + $0x30] sm:$0xff]
        %v1728 = vld [vmem:[#allocation2 + $0x38] sm:$0xff]
        %v1729 = vld [vmem:[#allocation2 + $0x40] sm:$0xff]
        %v1730 = vld [vmem:[#allocation2 + $0x48] sm:$0xff]
        %v1731 = vld [vmem:[#allocation2 + $0x50] sm:$0xff]
        %v1732 = vld [vmem:[#allocation2 + $0x58] sm:$0xff]
        %v1733 = vld [vmem:[#allocation2 + $0x60] sm:$0xff]
        %v1734 = vld [vmem:[#allocation2 + $0x68] sm:$0xff]
        %v1735 = vld [vmem:[#allocation2 + $0x70] sm:$0xff]
        %v1736 = vld [vmem:[#allocation2 + $0x78] sm:$0xff]
        %v1737 = vadd.f32 %v1721, %v1643
        %v1738 = vadd.f32 %v1722, %v1648
        %v1739 = vadd.f32 %v1723, %v1653
        %v1740 = vadd.f32 %v1724, %v1658
        %v1741 = vadd.f32 %v1725, %v1663
        %v1742 = vadd.f32 %v1726, %v1668
        %v1743 = vadd.f32 %v1727, %v1673
        %v1744 = vadd.f32 %v1728, %v1678
        %v1745 = vadd.f32 %v1729, %v1683
        %v1746 = vadd.f32 %v1730, %v1688
        %v1747 = vadd.f32 %v1731, %v1693
        %v1748 = vadd.f32 %v1732, %v1698
        %v1749 = vadd.f32 %v1733, %v1703
        %v1750 = vadd.f32 %v1734, %v1708
        %v1751 = vadd.f32 %v1735, %v1713
        %v1752 = vadd.f32 %v1736, %v1718
        %1753 = vst [vmem:[#allocation2] sm:$0xff] %v1737
        %1754 = vst [vmem:[#allocation2 + $0x8] sm:$0xff] %v1738
        %1755 = vst [vmem:[#allocation2 + $0x10] sm:$0xff] %v1739
        %1756 = vst [vmem:[#allocation2 + $0x18] sm:$0xff] %v1740
        %1757 = vst [vmem:[#allocation2 + $0x20] sm:$0xff] %v1741
        %1758 = vst [vmem:[#allocation2 + $0x28] sm:$0xff] %v1742
        %1759 = vst [vmem:[#allocation2 + $0x30] sm:$0xff] %v1743
        %1760 = vst [vmem:[#allocation2 + $0x38] sm:$0xff] %v1744
        %1761 = vst [vmem:[#allocation2 + $0x40] sm:$0xff] %v1745
        %1762 = vst [vmem:[#allocation2 + $0x48] sm:$0xff] %v1746
        %1763 = vst [vmem:[#allocation2 + $0x50] sm:$0xff] %v1747
        %1764 = vst [vmem:[#allocation2 + $0x58] sm:$0xff] %v1748
        %1765 = vst [vmem:[#allocation2 + $0x60] sm:$0xff] %v1749
        %1766 = vst [vmem:[#allocation2 + $0x68] sm:$0xff] %v1750
        %1767 = vst [vmem:[#allocation2 + $0x70] sm:$0xff] %v1751
        %1768 = vst [vmem:[#allocation2 + $0x78] sm:$0xff] %v1752
        %v1769 = vld [vmem:[%s1542 + $0x1] sm:$0xff]
        %v1770 = vld [vmem:[%s1542 + $0x9] sm:$0xff]
        %v1771 = vld [vmem:[%s1542 + $0x19] sm:$0xff]
        %v1772 = vld [vmem:[%s1542 + $0x21] sm:$0xff]
        %v1773 = vld [vmem:[%s1542 + $0x31] sm:$0xff]
        %v1774 = vld [vmem:[%s1542 + $0x39] sm:$0xff]
        %v1775 = vld [vmem:[%s1542 + $0x49] sm:$0xff]
        %v1776 = vld [vmem:[%s1542 + $0x51] sm:$0xff]
        %v1777 = vld [vmem:[%s1542 + $0x61] sm:$0xff]
        %v1778 = vld [vmem:[%s1542 + $0x69] sm:$0xff]
        %v1779 = vld [vmem:[%s1542 + $0x79] sm:$0xff]
        %v1780 = vld [vmem:[%s1542 + $0x81] sm:$0xff]
        %v1781 = vld [vmem:[%s1542 + $0x91] sm:$0xff]
        %v1782 = vld [vmem:[%s1542 + $0x99] sm:$0xff]
        %v1783 = vld [vmem:[%s1542 + $0xa9] sm:$0xff]
        %v1784 = vld [vmem:[%s1542 + $0xb1] sm:$0xff]
        %s1785 = scalar_lea.vmem %s1, 896
        %v1786 = vld [vmem:[%s1785] sm:$0xff]
        %v1787 = vld [vmem:[%s1785 + $0x8] sm:$0xff]
        %v1788 = vld [vmem:[%s1785 + $0x10] sm:$0xff]
        %v1789 = vld [vmem:[%s1785 + $0x18] sm:$0xff]
        %v1790 = vld [vmem:[%s1785 + $0x20] sm:$0xff]
        %v1791 = vld [vmem:[%s1785 + $0x28] sm:$0xff]
        %v1792 = vld [vmem:[%s1785 + $0x30] sm:$0xff]
        %v1793 = vld [vmem:[%s1785 + $0x38] sm:$0xff]
        %v1794 = vld [vmem:[%s1785 + $0x40] sm:$0xff]
        %v1795 = vld [vmem:[%s1785 + $0x48] sm:$0xff]
        %v1796 = vld [vmem:[%s1785 + $0x50] sm:$0xff]
        %v1797 = vld [vmem:[%s1785 + $0x58] sm:$0xff]
        %v1798 = vld [vmem:[%s1785 + $0x60] sm:$0xff]
        %v1799 = vld [vmem:[%s1785 + $0x68] sm:$0xff]
        %v1800 = vld [vmem:[%s1785 + $0x70] sm:$0xff]
        %v1801 = vld [vmem:[%s1785 + $0x78] sm:$0xff]
        %1802 = vmatprep.subr.mxu0 0.0
        %1803 = vmatpush1.msra.mxu0 %v1801
        %1804 = vmatprep.subr.mxu0 0.0
        %1805 = vmatpush1.msra.mxu0 %v1800
        %1806 = vmatprep.subr.mxu0 0.0
        %1807 = vmatpush1.msra.mxu0 %v1799
        %1808 = vmatprep.subr.mxu0 0.0
        %1809 = vmatpush1.msra.mxu0 %v1798
        %1810 = vmatprep.subr.mxu0 0.0
        %1811 = vmatpush1.msra.mxu0 %v1797
        %1812 = vmatprep.subr.mxu0 0.0
        %1813 = vmatpush1.msra.mxu0 %v1796
        %1814 = vmatprep.subr.mxu0 0.0
        %1815 = vmatpush1.msra.mxu0 %v1795
        %1816 = vmatprep.subr.mxu0 0.0
        %1817 = vmatpush1.msra.mxu0 %v1794
        %1818 = vmatprep.subr.mxu0 0.0
        %1819 = vmatpush1.msra.mxu0 %v1793
        %1820 = vmatprep.subr.mxu0 0.0
        %1821 = vmatpush1.msra.mxu0 %v1792
        %1822 = vmatprep.subr.mxu0 0.0
        %1823 = vmatpush1.msra.mxu0 %v1791
        %1824 = vmatprep.subr.mxu0 0.0
        %1825 = vmatpush1.msra.mxu0 %v1790
        %1826 = vmatprep.subr.mxu0 0.0
        %1827 = vmatpush1.msra.mxu0 %v1789
        %1828 = vmatprep.subr.mxu0 0.0
        %1829 = vmatpush1.msra.mxu0 %v1788
        %1830 = vmatprep.subr.mxu0 0.0
        %1831 = vmatpush1.msra.mxu0 %v1787
        %1832 = vmatprep.subr.mxu0 0.0
        %1833 = vmatpush1.msra.mxu0 %v1786
        %1834 = vmatprep.subr.mxu0 0.0
        %1835 = vmatpush2.msra.mxu0 0.0
        %1836 = vmatprep.subr.mxu0 0.0
        %1837 = vmatpush2.msra.mxu0 0.0
        %1838 = vmatprep.subr.mxu0 0.0
        %1839 = vmatpush2.msra.mxu0 0.0
        %1840 = vmatprep.subr.mxu0 0.0
        %1841 = vmatpush2.msra.mxu0 0.0
        %1842 = vmatprep.subr.mxu0 0.0
        %1843 = vmatpush2.msra.mxu0 0.0
        %1844 = vmatprep.subr.mxu0 0.0
        %1845 = vmatpush2.msra.mxu0 0.0
        %1846 = vmatprep.subr.mxu0 0.0
        %1847 = vmatpush2.msra.mxu0 0.0
        %1848 = vmatprep.subr.mxu0 0.0
        %1849 = vmatpush2.msra.mxu0 0.0
        %1850 = vmatprep.subr.mxu0 0.0
        %1851 = vmatpush2.msra.mxu0 0.0
        %1852 = vmatprep.subr.mxu0 0.0
        %1853 = vmatpush2.msra.mxu0 0.0
        %1854 = vmatprep.subr.mxu0 0.0
        %1855 = vmatpush2.msra.mxu0 0.0
        %1856 = vmatprep.subr.mxu0 0.0
        %1857 = vmatpush2.msra.mxu0 0.0
        %1858 = vmatprep.subr.mxu0 0.0
        %1859 = vmatpush2.msra.mxu0 0.0
        %1860 = vmatprep.subr.mxu0 0.0
        %1861 = vmatpush2.msra.mxu0 0.0
        %1862 = vmatprep.subr.mxu0 0.0
        %1863 = vmatpush2.msra.mxu0 0.0
        %1864 = vmatprep.subr.mxu0 0.0
        %1865 = vmatpush2.msra.mxu0 0.0
        %1866 = vmatprep.mubr.f32.mxu0 0.0
        %1867 = vmatmul.mubr.f32.gmra.mxu0 %v1769
        %v1868 = vpop.f32.mrf.mxu0
        %v1869 = vadd.f32 0.0, %v1868
        %v1870 = vpop.f32.mrf.mxu0
        %1871 = vmatprep.mubr.f32.mxu0 0.0
        %1872 = vmatmul.mubr.f32.gmra.mxu0 %v1770
        %v1873 = vpop.f32.mrf.mxu0
        %v1874 = vadd.f32 0.0, %v1873
        %v1875 = vpop.f32.mrf.mxu0
        %1876 = vmatprep.mubr.f32.mxu0 0.0
        %1877 = vmatmul.mubr.f32.gmra.mxu0 %v1771
        %v1878 = vpop.f32.mrf.mxu0
        %v1879 = vadd.f32 0.0, %v1878
        %v1880 = vpop.f32.mrf.mxu0
        %1881 = vmatprep.mubr.f32.mxu0 0.0
        %1882 = vmatmul.mubr.f32.gmra.mxu0 %v1772
        %v1883 = vpop.f32.mrf.mxu0
        %v1884 = vadd.f32 0.0, %v1883
        %v1885 = vpop.f32.mrf.mxu0
        %1886 = vmatprep.mubr.f32.mxu0 0.0
        %1887 = vmatmul.mubr.f32.gmra.mxu0 %v1773
        %v1888 = vpop.f32.mrf.mxu0
        %v1889 = vadd.f32 0.0, %v1888
        %v1890 = vpop.f32.mrf.mxu0
        %1891 = vmatprep.mubr.f32.mxu0 0.0
        %1892 = vmatmul.mubr.f32.gmra.mxu0 %v1774
        %v1893 = vpop.f32.mrf.mxu0
        %v1894 = vadd.f32 0.0, %v1893
        %v1895 = vpop.f32.mrf.mxu0
        %1896 = vmatprep.mubr.f32.mxu0 0.0
        %1897 = vmatmul.mubr.f32.gmra.mxu0 %v1775
        %v1898 = vpop.f32.mrf.mxu0
        %v1899 = vadd.f32 0.0, %v1898
        %v1900 = vpop.f32.mrf.mxu0
        %1901 = vmatprep.mubr.f32.mxu0 0.0
        %1902 = vmatmul.mubr.f32.gmra.mxu0 %v1776
        %v1903 = vpop.f32.mrf.mxu0
        %v1904 = vadd.f32 0.0, %v1903
        %v1905 = vpop.f32.mrf.mxu0
        %1906 = vmatprep.mubr.f32.mxu0 0.0
        %1907 = vmatmul.mubr.f32.gmra.mxu0 %v1777
        %v1908 = vpop.f32.mrf.mxu0
        %v1909 = vadd.f32 0.0, %v1908
        %v1910 = vpop.f32.mrf.mxu0
        %1911 = vmatprep.mubr.f32.mxu0 0.0
        %1912 = vmatmul.mubr.f32.gmra.mxu0 %v1778
        %v1913 = vpop.f32.mrf.mxu0
        %v1914 = vadd.f32 0.0, %v1913
        %v1915 = vpop.f32.mrf.mxu0
        %1916 = vmatprep.mubr.f32.mxu0 0.0
        %1917 = vmatmul.mubr.f32.gmra.mxu0 %v1779
        %v1918 = vpop.f32.mrf.mxu0
        %v1919 = vadd.f32 0.0, %v1918
        %v1920 = vpop.f32.mrf.mxu0
        %1921 = vmatprep.mubr.f32.mxu0 0.0
        %1922 = vmatmul.mubr.f32.gmra.mxu0 %v1780
        %v1923 = vpop.f32.mrf.mxu0
        %v1924 = vadd.f32 0.0, %v1923
        %v1925 = vpop.f32.mrf.mxu0
        %1926 = vmatprep.mubr.f32.mxu0 0.0
        %1927 = vmatmul.mubr.f32.gmra.mxu0 %v1781
        %v1928 = vpop.f32.mrf.mxu0
        %v1929 = vadd.f32 0.0, %v1928
        %v1930 = vpop.f32.mrf.mxu0
        %1931 = vmatprep.mubr.f32.mxu0 0.0
        %1932 = vmatmul.mubr.f32.gmra.mxu0 %v1782
        %v1933 = vpop.f32.mrf.mxu0
        %v1934 = vadd.f32 0.0, %v1933
        %v1935 = vpop.f32.mrf.mxu0
        %1936 = vmatprep.mubr.f32.mxu0 0.0
        %1937 = vmatmul.mubr.f32.gmra.mxu0 %v1783
        %v1938 = vpop.f32.mrf.mxu0
        %v1939 = vadd.f32 0.0, %v1938
        %v1940 = vpop.f32.mrf.mxu0
        %1941 = vmatprep.mubr.f32.mxu0 0.0
        %1942 = vmatmul.mubr.f32.gmra.mxu0 %v1784
        %v1943 = vpop.f32.mrf.mxu0
        %v1944 = vadd.f32 0.0, %v1943
        %v1945 = vpop.f32.mrf.mxu0
        %1946 = vdwg.mxu0
        %v1947 = vld [vmem:[#allocation2] sm:$0xff]
        %v1948 = vld [vmem:[#allocation2 + $0x8] sm:$0xff]
        %v1949 = vld [vmem:[#allocation2 + $0x10] sm:$0xff]
        %v1950 = vld [vmem:[#allocation2 + $0x18] sm:$0xff]
        %v1951 = vld [vmem:[#allocation2 + $0x20] sm:$0xff]
        %v1952 = vld [vmem:[#allocation2 + $0x28] sm:$0xff]
        %v1953 = vld [vmem:[#allocation2 + $0x30] sm:$0xff]
        %v1954 = vld [vmem:[#allocation2 + $0x38] sm:$0xff]
        %v1955 = vld [vmem:[#allocation2 + $0x40] sm:$0xff]
        %v1956 = vld [vmem:[#allocation2 + $0x48] sm:$0xff]
        %v1957 = vld [vmem:[#allocation2 + $0x50] sm:$0xff]
        %v1958 = vld [vmem:[#allocation2 + $0x58] sm:$0xff]
        %v1959 = vld [vmem:[#allocation2 + $0x60] sm:$0xff]
        %v1960 = vld [vmem:[#allocation2 + $0x68] sm:$0xff]
        %v1961 = vld [vmem:[#allocation2 + $0x70] sm:$0xff]
        %v1962 = vld [vmem:[#allocation2 + $0x78] sm:$0xff]
        %v1963 = vadd.f32 %v1947, %v1869
        %v1964 = vadd.f32 %v1948, %v1874
        %v1965 = vadd.f32 %v1949, %v1879
        %v1966 = vadd.f32 %v1950, %v1884
        %v1967 = vadd.f32 %v1951, %v1889
        %v1968 = vadd.f32 %v1952, %v1894
        %v1969 = vadd.f32 %v1953, %v1899
        %v1970 = vadd.f32 %v1954, %v1904
        %v1971 = vadd.f32 %v1955, %v1909
        %v1972 = vadd.f32 %v1956, %v1914
        %v1973 = vadd.f32 %v1957, %v1919
        %v1974 = vadd.f32 %v1958, %v1924
        %v1975 = vadd.f32 %v1959, %v1929
        %v1976 = vadd.f32 %v1960, %v1934
        %v1977 = vadd.f32 %v1961, %v1939
        %v1978 = vadd.f32 %v1962, %v1944
        %1979 = vst [vmem:[#allocation2] sm:$0xff] %v1963
        %1980 = vst [vmem:[#allocation2 + $0x8] sm:$0xff] %v1964
        %1981 = vst [vmem:[#allocation2 + $0x10] sm:$0xff] %v1965
        %1982 = vst [vmem:[#allocation2 + $0x18] sm:$0xff] %v1966
        %1983 = vst [vmem:[#allocation2 + $0x20] sm:$0xff] %v1967
        %1984 = vst [vmem:[#allocation2 + $0x28] sm:$0xff] %v1968
        %1985 = vst [vmem:[#allocation2 + $0x30] sm:$0xff] %v1969
        %1986 = vst [vmem:[#allocation2 + $0x38] sm:$0xff] %v1970
        %1987 = vst [vmem:[#allocation2 + $0x40] sm:$0xff] %v1971
        %1988 = vst [vmem:[#allocation2 + $0x48] sm:$0xff] %v1972
        %1989 = vst [vmem:[#allocation2 + $0x50] sm:$0xff] %v1973
        %1990 = vst [vmem:[#allocation2 + $0x58] sm:$0xff] %v1974
        %1991 = vst [vmem:[#allocation2 + $0x60] sm:$0xff] %v1975
        %1992 = vst [vmem:[#allocation2 + $0x68] sm:$0xff] %v1976
        %1993 = vst [vmem:[#allocation2 + $0x70] sm:$0xff] %v1977
        %1994 = vst [vmem:[#allocation2 + $0x78] sm:$0xff] %v1978
        %v1995 = vld [vmem:[%s1542 + $0x2] sm:$0xff]
        %v1996 = vld [vmem:[%s1542 + $0xa] sm:$0xff]
        %v1997 = vld [vmem:[%s1542 + $0x1a] sm:$0xff]
        %v1998 = vld [vmem:[%s1542 + $0x22] sm:$0xff]
        %v1999 = vld [vmem:[%s1542 + $0x32] sm:$0xff]
        %v2000 = vld [vmem:[%s1542 + $0x3a] sm:$0xff]
        %v2001 = vld [vmem:[%s1542 + $0x4a] sm:$0xff]
        %v2002 = vld [vmem:[%s1542 + $0x52] sm:$0xff]
        %v2003 = vld [vmem:[%s1542 + $0x62] sm:$0xff]
        %v2004 = vld [vmem:[%s1542 + $0x6a] sm:$0xff]
        %v2005 = vld [vmem:[%s1542 + $0x7a] sm:$0xff]
        %v2006 = vld [vmem:[%s1542 + $0x82] sm:$0xff]
        %v2007 = vld [vmem:[%s1542 + $0x92] sm:$0xff]
        %v2008 = vld [vmem:[%s1542 + $0x9a] sm:$0xff]
        %v2009 = vld [vmem:[%s1542 + $0xaa] sm:$0xff]
        %v2010 = vld [vmem:[%s1542 + $0xb2] sm:$0xff]
        %s2011 = scalar_lea.vmem %s1, 1024
        %v2012 = vld [vmem:[%s2011] sm:$0xff]
        %v2013 = vld [vmem:[%s2011 + $0x8] sm:$0xff]
        %v2014 = vld [vmem:[%s2011 + $0x10] sm:$0xff]
        %v2015 = vld [vmem:[%s2011 + $0x18] sm:$0xff]
        %v2016 = vld [vmem:[%s2011 + $0x20] sm:$0xff]
        %v2017 = vld [vmem:[%s2011 + $0x28] sm:$0xff]
        %v2018 = vld [vmem:[%s2011 + $0x30] sm:$0xff]
        %v2019 = vld [vmem:[%s2011 + $0x38] sm:$0xff]
        %v2020 = vld [vmem:[%s2011 + $0x40] sm:$0xff]
        %v2021 = vld [vmem:[%s2011 + $0x48] sm:$0xff]
        %v2022 = vld [vmem:[%s2011 + $0x50] sm:$0xff]
        %v2023 = vld [vmem:[%s2011 + $0x58] sm:$0xff]
        %v2024 = vld [vmem:[%s2011 + $0x60] sm:$0xff]
        %v2025 = vld [vmem:[%s2011 + $0x68] sm:$0xff]
        %v2026 = vld [vmem:[%s2011 + $0x70] sm:$0xff]
        %v2027 = vld [vmem:[%s2011 + $0x78] sm:$0xff]
        %2028 = vmatprep.subr.mxu0 0.0
        %2029 = vmatpush1.msra.mxu0 %v2027
        %2030 = vmatprep.subr.mxu0 0.0
        %2031 = vmatpush1.msra.mxu0 %v2026
        %2032 = vmatprep.subr.mxu0 0.0
        %2033 = vmatpush1.msra.mxu0 %v2025
        %2034 = vmatprep.subr.mxu0 0.0
        %2035 = vmatpush1.msra.mxu0 %v2024
        %2036 = vmatprep.subr.mxu0 0.0
        %2037 = vmatpush1.msra.mxu0 %v2023
        %2038 = vmatprep.subr.mxu0 0.0
        %2039 = vmatpush1.msra.mxu0 %v2022
        %2040 = vmatprep.subr.mxu0 0.0
        %2041 = vmatpush1.msra.mxu0 %v2021
        %2042 = vmatprep.subr.mxu0 0.0
        %2043 = vmatpush1.msra.mxu0 %v2020
        %2044 = vmatprep.subr.mxu0 0.0
        %2045 = vmatpush1.msra.mxu0 %v2019
        %2046 = vmatprep.subr.mxu0 0.0
        %2047 = vmatpush1.msra.mxu0 %v2018
        %2048 = vmatprep.subr.mxu0 0.0
        %2049 = vmatpush1.msra.mxu0 %v2017
        %2050 = vmatprep.subr.mxu0 0.0
        %2051 = vmatpush1.msra.mxu0 %v2016
        %2052 = vmatprep.subr.mxu0 0.0
        %2053 = vmatpush1.msra.mxu0 %v2015
        %2054 = vmatprep.subr.mxu0 0.0
        %2055 = vmatpush1.msra.mxu0 %v2014
        %2056 = vmatprep.subr.mxu0 0.0
        %2057 = vmatpush1.msra.mxu0 %v2013
        %2058 = vmatprep.subr.mxu0 0.0
        %2059 = vmatpush1.msra.mxu0 %v2012
        %2060 = vmatprep.subr.mxu0 0.0
        %2061 = vmatpush2.msra.mxu0 0.0
        %2062 = vmatprep.subr.mxu0 0.0
        %2063 = vmatpush2.msra.mxu0 0.0
        %2064 = vmatprep.subr.mxu0 0.0
        %2065 = vmatpush2.msra.mxu0 0.0
        %2066 = vmatprep.subr.mxu0 0.0
        %2067 = vmatpush2.msra.mxu0 0.0
        %2068 = vmatprep.subr.mxu0 0.0
        %2069 = vmatpush2.msra.mxu0 0.0
        %2070 = vmatprep.subr.mxu0 0.0
        %2071 = vmatpush2.msra.mxu0 0.0
        %2072 = vmatprep.subr.mxu0 0.0
        %2073 = vmatpush2.msra.mxu0 0.0
        %2074 = vmatprep.subr.mxu0 0.0
        %2075 = vmatpush2.msra.mxu0 0.0
        %2076 = vmatprep.subr.mxu0 0.0
        %2077 = vmatpush2.msra.mxu0 0.0
        %2078 = vmatprep.subr.mxu0 0.0
        %2079 = vmatpush2.msra.mxu0 0.0
        %2080 = vmatprep.subr.mxu0 0.0
        %2081 = vmatpush2.msra.mxu0 0.0
        %2082 = vmatprep.subr.mxu0 0.0
        %2083 = vmatpush2.msra.mxu0 0.0
        %2084 = vmatprep.subr.mxu0 0.0
        %2085 = vmatpush2.msra.mxu0 0.0
        %2086 = vmatprep.subr.mxu0 0.0
        %2087 = vmatpush2.msra.mxu0 0.0
        %2088 = vmatprep.subr.mxu0 0.0
        %2089 = vmatpush2.msra.mxu0 0.0
        %2090 = vmatprep.subr.mxu0 0.0
        %2091 = vmatpush2.msra.mxu0 0.0
        %2092 = vmatprep.mubr.f32.mxu0 0.0
        %2093 = vmatmul.mubr.f32.gmra.mxu0 %v1995
        %v2094 = vpop.f32.mrf.mxu0
        %v2095 = vadd.f32 0.0, %v2094
        %v2096 = vpop.f32.mrf.mxu0
        %2097 = vmatprep.mubr.f32.mxu0 0.0
        %2098 = vmatmul.mubr.f32.gmra.mxu0 %v1996
        %v2099 = vpop.f32.mrf.mxu0
        %v2100 = vadd.f32 0.0, %v2099
        %v2101 = vpop.f32.mrf.mxu0
        %2102 = vmatprep.mubr.f32.mxu0 0.0
        %2103 = vmatmul.mubr.f32.gmra.mxu0 %v1997
        %v2104 = vpop.f32.mrf.mxu0
        %v2105 = vadd.f32 0.0, %v2104
        %v2106 = vpop.f32.mrf.mxu0
        %2107 = vmatprep.mubr.f32.mxu0 0.0
        %2108 = vmatmul.mubr.f32.gmra.mxu0 %v1998
        %v2109 = vpop.f32.mrf.mxu0
        %v2110 = vadd.f32 0.0, %v2109
        %v2111 = vpop.f32.mrf.mxu0
        %2112 = vmatprep.mubr.f32.mxu0 0.0
        %2113 = vmatmul.mubr.f32.gmra.mxu0 %v1999
        %v2114 = vpop.f32.mrf.mxu0
        %v2115 = vadd.f32 0.0, %v2114
        %v2116 = vpop.f32.mrf.mxu0
        %2117 = vmatprep.mubr.f32.mxu0 0.0
        %2118 = vmatmul.mubr.f32.gmra.mxu0 %v2000
        %v2119 = vpop.f32.mrf.mxu0
        %v2120 = vadd.f32 0.0, %v2119
        %v2121 = vpop.f32.mrf.mxu0
        %2122 = vmatprep.mubr.f32.mxu0 0.0
        %2123 = vmatmul.mubr.f32.gmra.mxu0 %v2001
        %v2124 = vpop.f32.mrf.mxu0
        %v2125 = vadd.f32 0.0, %v2124
        %v2126 = vpop.f32.mrf.mxu0
        %2127 = vmatprep.mubr.f32.mxu0 0.0
        %2128 = vmatmul.mubr.f32.gmra.mxu0 %v2002
        %v2129 = vpop.f32.mrf.mxu0
        %v2130 = vadd.f32 0.0, %v2129
        %v2131 = vpop.f32.mrf.mxu0
        %2132 = vmatprep.mubr.f32.mxu0 0.0
        %2133 = vmatmul.mubr.f32.gmra.mxu0 %v2003
        %v2134 = vpop.f32.mrf.mxu0
        %v2135 = vadd.f32 0.0, %v2134
        %v2136 = vpop.f32.mrf.mxu0
        %2137 = vmatprep.mubr.f32.mxu0 0.0
        %2138 = vmatmul.mubr.f32.gmra.mxu0 %v2004
        %v2139 = vpop.f32.mrf.mxu0
        %v2140 = vadd.f32 0.0, %v2139
        %v2141 = vpop.f32.mrf.mxu0
        %2142 = vmatprep.mubr.f32.mxu0 0.0
        %2143 = vmatmul.mubr.f32.gmra.mxu0 %v2005
        %v2144 = vpop.f32.mrf.mxu0
        %v2145 = vadd.f32 0.0, %v2144
        %v2146 = vpop.f32.mrf.mxu0
        %2147 = vmatprep.mubr.f32.mxu0 0.0
        %2148 = vmatmul.mubr.f32.gmra.mxu0 %v2006
        %v2149 = vpop.f32.mrf.mxu0
        %v2150 = vadd.f32 0.0, %v2149
        %v2151 = vpop.f32.mrf.mxu0
        %2152 = vmatprep.mubr.f32.mxu0 0.0
        %2153 = vmatmul.mubr.f32.gmra.mxu0 %v2007
        %v2154 = vpop.f32.mrf.mxu0
        %v2155 = vadd.f32 0.0, %v2154
        %v2156 = vpop.f32.mrf.mxu0
        %2157 = vmatprep.mubr.f32.mxu0 0.0
        %2158 = vmatmul.mubr.f32.gmra.mxu0 %v2008
        %v2159 = vpop.f32.mrf.mxu0
        %v2160 = vadd.f32 0.0, %v2159
        %v2161 = vpop.f32.mrf.mxu0
        %2162 = vmatprep.mubr.f32.mxu0 0.0
        %2163 = vmatmul.mubr.f32.gmra.mxu0 %v2009
        %v2164 = vpop.f32.mrf.mxu0
        %v2165 = vadd.f32 0.0, %v2164
        %v2166 = vpop.f32.mrf.mxu0
        %2167 = vmatprep.mubr.f32.mxu0 0.0
        %2168 = vmatmul.mubr.f32.gmra.mxu0 %v2010
        %v2169 = vpop.f32.mrf.mxu0
        %v2170 = vadd.f32 0.0, %v2169
        %v2171 = vpop.f32.mrf.mxu0
        %2172 = vdwg.mxu0
        %v2173 = vld [vmem:[#allocation2] sm:$0xff]
        %v2174 = vld [vmem:[#allocation2 + $0x8] sm:$0xff]
        %v2175 = vld [vmem:[#allocation2 + $0x10] sm:$0xff]
        %v2176 = vld [vmem:[#allocation2 + $0x18] sm:$0xff]
        %v2177 = vld [vmem:[#allocation2 + $0x20] sm:$0xff]
        %v2178 = vld [vmem:[#allocation2 + $0x28] sm:$0xff]
        %v2179 = vld [vmem:[#allocation2 + $0x30] sm:$0xff]
        %v2180 = vld [vmem:[#allocation2 + $0x38] sm:$0xff]
        %v2181 = vld [vmem:[#allocation2 + $0x40] sm:$0xff]
        %v2182 = vld [vmem:[#allocation2 + $0x48] sm:$0xff]
        %v2183 = vld [vmem:[#allocation2 + $0x50] sm:$0xff]
        %v2184 = vld [vmem:[#allocation2 + $0x58] sm:$0xff]
        %v2185 = vld [vmem:[#allocation2 + $0x60] sm:$0xff]
        %v2186 = vld [vmem:[#allocation2 + $0x68] sm:$0xff]
        %v2187 = vld [vmem:[#allocation2 + $0x70] sm:$0xff]
        %v2188 = vld [vmem:[#allocation2 + $0x78] sm:$0xff]
        %v2189 = vadd.f32 %v2173, %v2095
        %v2190 = vadd.f32 %v2174, %v2100
        %v2191 = vadd.f32 %v2175, %v2105
        %v2192 = vadd.f32 %v2176, %v2110
        %v2193 = vadd.f32 %v2177, %v2115
        %v2194 = vadd.f32 %v2178, %v2120
        %v2195 = vadd.f32 %v2179, %v2125
        %v2196 = vadd.f32 %v2180, %v2130
        %v2197 = vadd.f32 %v2181, %v2135
        %v2198 = vadd.f32 %v2182, %v2140
        %v2199 = vadd.f32 %v2183, %v2145
        %v2200 = vadd.f32 %v2184, %v2150
        %v2201 = vadd.f32 %v2185, %v2155
        %v2202 = vadd.f32 %v2186, %v2160
        %v2203 = vadd.f32 %v2187, %v2165
        %v2204 = vadd.f32 %v2188, %v2170
        %2205 = vst [vmem:[#allocation2] sm:$0xff] %v2189
        %2206 = vst [vmem:[#allocation2 + $0x8] sm:$0xff] %v2190
        %2207 = vst [vmem:[#allocation2 + $0x10] sm:$0xff] %v2191
        %2208 = vst [vmem:[#allocation2 + $0x18] sm:$0xff] %v2192
        %2209 = vst [vmem:[#allocation2 + $0x20] sm:$0xff] %v2193
        %2210 = vst [vmem:[#allocation2 + $0x28] sm:$0xff] %v2194
        %2211 = vst [vmem:[#allocation2 + $0x30] sm:$0xff] %v2195
        %2212 = vst [vmem:[#allocation2 + $0x38] sm:$0xff] %v2196
        %2213 = vst [vmem:[#allocation2 + $0x40] sm:$0xff] %v2197
        %2214 = vst [vmem:[#allocation2 + $0x48] sm:$0xff] %v2198
        %2215 = vst [vmem:[#allocation2 + $0x50] sm:$0xff] %v2199
        %2216 = vst [vmem:[#allocation2 + $0x58] sm:$0xff] %v2200
        %2217 = vst [vmem:[#allocation2 + $0x60] sm:$0xff] %v2201
        %2218 = vst [vmem:[#allocation2 + $0x68] sm:$0xff] %v2202
        %2219 = vst [vmem:[#allocation2 + $0x70] sm:$0xff] %v2203
        %2220 = vst [vmem:[#allocation2 + $0x78] sm:$0xff] %v2204
        %v2221 = vld [vmem:[#allocation2] sm:$0xff]
        %v2222 = vld [vmem:[#allocation2 + $0x8] sm:$0xff]
        %v2223 = vld [vmem:[#allocation2 + $0x10] sm:$0xff]
        %v2224 = vld [vmem:[#allocation2 + $0x18] sm:$0xff]
        %v2225 = vld [vmem:[#allocation2 + $0x20] sm:$0xff]
        %v2226 = vld [vmem:[#allocation2 + $0x28] sm:$0xff]
        %v2227 = vld [vmem:[#allocation2 + $0x30] sm:$0xff]
        %v2228 = vld [vmem:[#allocation2 + $0x38] sm:$0xff]
        %v2229 = vld [vmem:[#allocation2 + $0x40] sm:$0xff]
        %v2230 = vld [vmem:[#allocation2 + $0x48] sm:$0xff]
        %v2231 = vld [vmem:[#allocation2 + $0x50] sm:$0xff]
        %v2232 = vld [vmem:[#allocation2 + $0x58] sm:$0xff]
        %v2233 = vld [vmem:[#allocation2 + $0x60] sm:$0xff]
        %v2234 = vld [vmem:[#allocation2 + $0x68] sm:$0xff]
        %v2235 = vld [vmem:[#allocation2 + $0x70] sm:$0xff]
        %v2236 = vld [vmem:[#allocation2 + $0x78] sm:$0xff]
        %v2237 = vld [vmem:[%s2] sm:$0x1]
        %v2239 = vlaneseq
        %v2240 = vshrl.u32 %v2239, 7
        %v2241 = vsub.s32 0, %v2240
        %v2242 = vrot.slane %v2237, %v2241
        %v2244 = vmul.f32 %v2221, %v2242
        %v2245 = vmul.f32 %v2222, %v2242
        %v2246 = vmul.f32 %v2223, %v2242
        %v2247 = vmul.f32 %v2224, %v2242
        %v2248 = vmul.f32 %v2225, %v2242
        %v2249 = vmul.f32 %v2226, %v2242
        %v2250 = vmul.f32 %v2227, %v2242
        %v2251 = vmul.f32 %v2228, %v2242
        %v2252 = vmul.f32 %v2229, %v2242
        %v2253 = vmul.f32 %v2230, %v2242
        %v2254 = vmul.f32 %v2231, %v2242
        %v2255 = vmul.f32 %v2232, %v2242
        %v2256 = vmul.f32 %v2233, %v2242
        %v2257 = vmul.f32 %v2234, %v2242
        %v2258 = vmul.f32 %v2235, %v2242
        %v2259 = vmul.f32 %v2236, %v2242
        %v2260 = vld [vmem:[%s3] sm:$0x1]
        %v2262 = vlaneseq
        %v2263 = vshrl.u32 %v2262, 7
        %v2264 = vsub.s32 0, %v2263
        %v2265 = vrot.slane %v2260, %v2264
        %v2267 = vadd.f32 %v2244, %v2265
        %v2268 = vadd.f32 %v2245, %v2265
        %v2269 = vadd.f32 %v2246, %v2265
        %v2270 = vadd.f32 %v2247, %v2265
        %v2271 = vadd.f32 %v2248, %v2265
        %v2272 = vadd.f32 %v2249, %v2265
        %v2273 = vadd.f32 %v2250, %v2265
        %v2274 = vadd.f32 %v2251, %v2265
        %v2275 = vadd.f32 %v2252, %v2265
        %v2276 = vadd.f32 %v2253, %v2265
        %v2277 = vadd.f32 %v2254, %v2265
        %v2278 = vadd.f32 %v2255, %v2265
        %v2279 = vadd.f32 %v2256, %v2265
        %v2280 = vadd.f32 %v2257, %v2265
        %v2281 = vadd.f32 %v2258, %v2265
        %v2282 = vadd.f32 %v2259, %v2265
        %v2283 = vmax.f32 %v2267, 0.0
        %v2284 = vmax.f32 %v2268, 0.0
        %v2285 = vmax.f32 %v2269, 0.0
        %v2286 = vmax.f32 %v2270, 0.0
        %v2287 = vmax.f32 %v2271, 0.0
        %v2288 = vmax.f32 %v2272, 0.0
        %v2289 = vmax.f32 %v2273, 0.0
        %v2290 = vmax.f32 %v2274, 0.0
        %v2291 = vmax.f32 %v2275, 0.0
        %v2292 = vmax.f32 %v2276, 0.0
        %v2293 = vmax.f32 %v2277, 0.0
        %v2294 = vmax.f32 %v2278, 0.0
        %v2295 = vmax.f32 %v2279, 0.0
        %v2296 = vmax.f32 %v2280, 0.0
        %v2297 = vmax.f32 %v2281, 0.0
        %v2298 = vmax.f32 %v2282, 0.0
        %2299 = vst [vmem:[%s204] sm:$0xff] %v2283
        %2300 = vst [vmem:[%s204 + $0x8] sm:$0xff] %v2284
        %2301 = vst [vmem:[%s204 + $0x10] sm:$0xff] %v2285
        %2302 = vst [vmem:[%s204 + $0x18] sm:$0xff] %v2286
        %2303 = vst [vmem:[%s204 + $0x20] sm:$0xff] %v2287
        %2304 = vst [vmem:[%s204 + $0x28] sm:$0xff] %v2288
        %2305 = vst [vmem:[%s204 + $0x30] sm:$0xff] %v2289
        %2306 = vst [vmem:[%s204 + $0x38] sm:$0xff] %v2290
        %2307 = vst [vmem:[%s204 + $0x40] sm:$0xff] %v2291
        %2308 = vst [vmem:[%s204 + $0x48] sm:$0xff] %v2292
        %2309 = vst [vmem:[%s204 + $0x50] sm:$0xff] %v2293
        %2310 = vst [vmem:[%s204 + $0x58] sm:$0xff] %v2294
        %2311 = vst [vmem:[%s204 + $0x60] sm:$0xff] %v2295
        %2312 = vst [vmem:[%s204 + $0x68] sm:$0xff] %v2296
        %2313 = vst [vmem:[%s204 + $0x70] sm:$0xff] %v2297
        %2314 = vst [vmem:[%s204 + $0x78] sm:$0xff] %v2298
        %s2315 = sand.u32 %s129, 1
        %s2316 = scalar_lea.sflag [#allocation4], %s2315
        %s2317 = sand.u32 %s129, 1
        %s2318 = smul.addr %s2317, 128
        %s2319 = scalar_lea.vmem [#allocation3], %s2318
        // Predicated region
        $region37: #{tpu_custom_call.1} parent=35 // pred_check
          %p2320 = pneg %p139
        $region38: #{tpu_custom_call.1} parent=35 // pred_check_branch
          %2322 = sbr.rel (%p2320) target = $region40
        $region39: #{tpu_custom_call.1} parent=35 // pred_region
          %s2323 = smul.u32 8, %s23
          %s2325 = ssub.s32 2048, 2048
          %2326 = vsyncadd %s2316, %s2325
          %s2327 = smul.addr %s2323, 2
          %s2328 = smul.addr %s22, 32
          %s2329 = sadd.s32 %s2327, %s2328
          %s2330 = smul.addr %s2329, 128
          %s2331 = scalar_lea.hbm %s4, %s2330
          %s2332 = sshll.u32 %s2319, 4
          %s2333 = int_to_ptr.vmem [resolvable:$true] %s2332
          %2338 = dma.vmem_to_hbm [thread:$0]  %s2333, 2048, %s2331, %s2316, 128, 128, 8
        $region40: #{tpu_custom_call.1} parent=35 // pred_fallthru
          _
      $region36: #{tpu_custom_call.1} parent=5 // pred_fallthru
        _
      %p2339 = scmp.le.s32.totalorder 2, %s13
      // Predicated region
      $region41: #{tpu_custom_call.1} parent=5 // pred_check
        %p2340 = pneg %p2339
      $region42: #{tpu_custom_call.1} parent=5 // pred_check_branch
        %2342 = sbr.rel (%p2340) target = $region44
      $region43: #{tpu_custom_call.1} parent=5 // pred_region
        %s2343 = ssub.s32 %s13, 2
        // Predicated region
        $region45: #{tpu_custom_call.1} parent=43 // pred_check
          %p2344 = pneg %p145
        $region46: #{tpu_custom_call.1} parent=43 // pred_check_branch
          %2346 = sbr.rel (%p2344) target = $region48
        $region47: #{tpu_custom_call.1} parent=43 // pred_region
          %s2347 = sand.u32 %s130, 1
          %s2348 = scalar_lea.sflag [#allocation4], %s2347
          %s2349 = sand.u32 %s130, 1
          %s2350 = smul.addr %s2349, 128
          %s2351 = scalar_lea.vmem [#allocation3], %s2350
          %2352 = dma.done %s2348, 2048
        $region48: #{tpu_custom_call.1} parent=43 // pred_fallthru
          _
      $region44: #{tpu_custom_call.1} parent=5 // pred_fallthru
        _
    $region6: #{tpu_custom_call.1} parent=1 // loop_footer
      %s17 = sadd.s32 1, %s13
    $region7: #{tpu_custom_call.1} parent=1 // loop_footer_branch
      %12 = sbr.rel target = $region3
    $region8: #{tpu_custom_call.1} parent=1 // loop_exit
      _
    %2353 = vsyncpa [#allocation4], 1
    %s2354 = scalar_lea.sflag [#allocation4], 1
    %2355 = vsyncpa %s2354, 1

</llo_original>
